<compile_context>
chip_gen: v5e
topology: v5e:2x2
jax: 0.10.0
libtpu: 0.0.40
codegen_flags: <defaults>
</compile_context>

<pallas_src>
import math
import functools

import jax
import jax.numpy as jnp
from jax.experimental import pallas as pl
from jax.experimental.pallas import tpu as pltpu


def _round_up(x, m):
    return (x + m - 1) // m * m


def _num_tensorcores():
    try:
        info = pltpu.get_tpu_info()
    except Exception:
        return 1
    for attr in ("num_cores", "num_tensorcores", "tensorcore_count"):
        v = getattr(info, attr, None)
        if v:
            try:
                return int(v)
            except (TypeError, ValueError):
                pass
    return 1


def _vmem_limit_bytes():
    cap = None
    try:
        cap = getattr(pltpu.get_tpu_info(), "vmem_capacity_bytes", None)
    except Exception:
        cap = None
    if not cap:
        return 32 << 20                       # Pallas default scoped limit
    # leave headroom; ~56 MiB on v7x (64 MiB), 100 MiB on v5e/v6e (128 MiB)
    return int(min(int(cap) * 7 // 8, 100 << 20))


def _block_act_bytes_per_elem(sp, d_pad, f_pad, wtot, hv, heads, dk, dv):
    """Rough per-batch-element VMEM working set of one grid step (bytes)."""
    f32 = 4
    a = sp * (6 * d_pad + wtot + f_pad + hv) * f32   # carry/x/x1/ff/y, qkv, h1, ctx
    a += 2 * heads * sp * sp * f32                   # scores + probabilities
    a += 3 * heads * sp * max(dk, dv) * 2            # bf16 q/k/v head stacks
    return a


def _choose_block_b(batch, seq, per_elem_bytes, act_budget, target_rows=512):
    """Batch elements per grid step: fill >=512 MXU rows (v6e/v7x MXU is
    256-wide), stay inside the VMEM activation budget, and keep >=2 parallel
    batch blocks only when the chip actually has >1 TensorCore (v7x)."""
    bb = max(1, min(batch, max(1, target_rows // max(seq, 1))))
    while batch % bb:
        bb -= 1
    while bb > 1 and bb * per_elem_bytes > act_budget:
        bb -= 1
        while batch % bb:
            bb -= 1
    if _num_tensorcores() > 1 and batch // bb < 2 and bb > 1:
        bb = max(1, bb // 2)
        while batch % bb:
            bb -= 1
    return bb


def _masked_layer_norm(x, gamma, beta, valid, d_true, eps=1e-5):
    """LayerNorm over the first `d_true` columns of a lane-padded [N, Dp] slab.

    Padded columns of `x` are zero by construction; `valid` is a [1, Dp] 0/1
    mask of the real columns.  gamma/beta are zero-padded, so the padded lanes
    of the result stay exactly zero (keeps the residual-stream invariant).
    eps = 1e-5 matches PyTorch nn.LayerNorm.
    """
    mu = jnp.sum(x, axis=-1, keepdims=True) * (1.0 / d_true)
    xc = (x - mu) * valid
    var = jnp.sum(xc * xc, axis=-1, keepdims=True) * (1.0 / d_true)
    return xc * jax.lax.rsqrt(var + eps) * gamma + beta


def _encoder_kernel(heads, d_k, d_v, d_model, seq, bb, resident, mxu_dtype,
                    x_ref, bias_ref, valid_ref,
                    wqkv_ref, bqkv_ref, wo_ref, bo_ref,
                    ln1_g_ref, ln1_b_ref,
                    w1_ref, b1_ref, w2_ref, b2_ref,
                    ln2_g_ref, ln2_b_ref,
                    out_ref):
    layer = pl.program_id(1)
    # Resident weights: whole stack in VMEM, index by layer.  Streamed: each
    # grid step sees a single-layer block -> index 0.
    wi = layer if resident else 0

    d_pad = x_ref.shape[-1]
    hk = heads * d_k
    hv = heads * d_v
    rows = bb * seq

    # ---- out_ref doubles as the f32 layer carry (constant block index over
    # the layer axis -> VMEM resident for the whole sweep, no extra scratch).
    @pl.when(layer == 0)
    def _():
        out_ref[...] = x_ref[...]

    x = out_ref[...]                                  # [bb, Sp, Dp] f32
    xf = x.reshape(rows, d_pad)                       # [bb*Sp, Dp]
    valid = valid_ref[...]                            # [1, Dp]   (hoisted)

    # ---- fused QKV projection: one lane-dense MXU matmul over all rows -----
    qkv = jnp.dot(xf.astype(mxu_dtype), wqkv_ref[wi],
                  preferred_element_type=jnp.float32) + bqkv_ref[wi]
    qkvm = qkv.reshape(bb, seq, -1).astype(mxu_dtype)

    # Head-batched stacks [heads*bb, Sp, d] for the batched score/PV einsums.
    qh = jnp.concatenate(
        [qkvm[:, :, h * d_k:(h + 1) * d_k] for h in range(heads)], axis=0)
    kh = jnp.concatenate(
        [qkvm[:, :, hk + h * d_k:hk + (h + 1) * d_k] for h in range(heads)],
        axis=0)
    vh = jnp.concatenate(
        [qkvm[:, :, 2 * hk + h * d_v:2 * hk + (h + 1) * d_v]
         for h in range(heads)], axis=0)

    scale = 1.0 / math.sqrt(d_k)
    s = jnp.einsum('bqd,bkd->bqk', qh, kh,
                   preferred_element_type=jnp.float32) * scale
    # additive key-padding bias shared by all heads: broadcast over a free
    # leading-dim split instead of a heads-way concat (pure filler removal).
    s4 = s.reshape(heads, bb, seq, seq) + bias_ref[...].reshape(1, bb, 1, seq)
    s4 = s4 - jnp.max(s4, axis=-1, keepdims=True)
    p4 = jnp.exp(s4)
    p4 = p4 * pl.reciprocal(jnp.sum(p4, axis=-1, keepdims=True), approx=True)
    p = p4.reshape(heads * bb, seq, seq)

    ctx = jnp.einsum('bqk,bkd->bqd', p.astype(mxu_dtype), vh,
                     preferred_element_type=jnp.float32)       # [heads*bb,Sp,dv]
    ctx = jnp.concatenate(
        [ctx[h * bb:(h + 1) * bb] for h in range(heads)], axis=-1)  # [bb,Sp,hv]
    ctx = ctx.reshape(rows, hv)

    attn = jnp.dot(ctx.astype(mxu_dtype), wo_ref[wi],
                   preferred_element_type=jnp.float32) + bo_ref[wi]
    x1 = _masked_layer_norm(xf + attn, ln1_g_ref[wi], ln1_b_ref[wi],
                            valid, d_model)

    # ---- position-wise feed forward ----------------------------------------
    h1 = jnp.maximum(
        jnp.dot(x1.astype(mxu_dtype), w1_ref[wi],
                preferred_element_type=jnp.float32) + b1_ref[wi], 0.0)
    ff = jnp.dot(h1.astype(mxu_dtype), w2_ref[wi],
                 preferred_element_type=jnp.float32) + b2_ref[wi]
    y = _masked_layer_norm(x1 + ff, ln2_g_ref[wi], ln2_b_ref[wi],
                           valid, d_model)

    out_ref[...] = y.reshape(bb, seq, d_pad)


def encoder_forward(h, mask, packed, *, heads, d_k, d_v, d_model, nlayers,
                    mxu_dtype=jnp.bfloat16, block_b=None):
    """Equivalent of Encoder.forward(bg, h, ..., mask=mask) (mask: 1 = valid
    node, 0 = padding).  All blocks fused into one pallas_call with
    grid = (batch_blocks, nlayers)."""
    B, S, D = h.shape
    assert D == d_model
    d_pad = _round_up(d_model, 128)
    f_pad = packed['w1'].shape[-1]
    wtot = packed['wqkv'].shape[-1]
    hv = heads * d_v
    # Lane/sublane-friendly sequence padding (padded keys folded into mask).
    s_pad = _round_up(S, 128) if S > 64 else _round_up(S, 8)

    if mask is None:
        mask = jnp.ones((B, 1, S), jnp.float32)
    maskp = jnp.pad(mask.astype(jnp.float32), ((0, 0), (0, 0), (0, s_pad - S)))
    bias = (maskp - 1.0) * 1e9                        # 0 valid / -1e9 padded key
    valid = (jnp.arange(d_pad, dtype=jnp.int32)[None, :] < d_model
             ).astype(jnp.float32)                    # [1, Dp] real-column mask

    x = jnp.pad(h.astype(jnp.float32),
                ((0, 0), (0, s_pad - S), (0, d_pad - D)))

    # ---- VMEM budgeting / generation-aware choices --------------------------
    vmem_limit = _vmem_limit_bytes()
    weight_bytes = sum(int(v.size) * v.dtype.itemsize for v in packed.values())
    # Weights resident (fetched once) only when the full stack comfortably
    # fits (true on v5e/v6e at typical sizes, false on v7x / huge models).
    resident = 2 * weight_bytes <= vmem_limit // 2
    per_layer_bytes = weight_bytes // max(nlayers, 1)
    w_vmem = 2 * weight_bytes if resident else 2 * per_layer_bytes
    act_budget = max(vmem_limit - w_vmem, vmem_limit // 8)
    per_elem = _block_act_bytes_per_elem(s_pad, d_pad, f_pad, wtot, hv,
                                         heads, d_k, d_v)
    bb = block_b if block_b is not None else _choose_block_b(
        B, s_pad, per_elem, act_budget)
    assert B % bb == 0

    grid = (B // bb, nlayers)

    def xmap(b, l):
        return (b, 0, 0)

    def cmap(b, l):
        return (0, 0)

    if resident:
        def wspec(arr):
            return pl.BlockSpec(arr.shape, lambda b, l: (0, 0, 0))
    else:
        def wspec(arr):
            return pl.BlockSpec((1,) + arr.shape[1:], lambda b, l: (l, 0, 0))

    in_specs = [
        pl.BlockSpec((bb, s_pad, d_pad), xmap),    # x (padded, lane-dense)
        pl.BlockSpec((bb, 1, s_pad), xmap),        # additive key-padding bias
        pl.BlockSpec((1, d_pad), cmap),            # real-column mask (hoisted)
        wspec(packed['wqkv']), wspec(packed['bqkv']),
        wspec(packed['wo']), wspec(packed['bo']),
        wspec(packed['ln1_g']), wspec(packed['ln1_b']),
        wspec(packed['w1']), wspec(packed['b1']),
        wspec(packed['w2']), wspec(packed['b2']),
        wspec(packed['ln2_g']), wspec(packed['ln2_b']),
    ]
    out_spec = pl.BlockSpec((bb, s_pad, d_pad), xmap)

    kernel = functools.partial(_encoder_kernel, heads, d_k, d_v, d_model,
                               s_pad, bb, resident, mxu_dtype)
    out = pl.pallas_call(
        kernel,
        out_shape=jax.ShapeDtypeStruct((B, s_pad, d_pad), jnp.float32),
        grid_spec=pltpu.PrefetchScalarGridSpec(
            num_scalar_prefetch=0,
            grid=grid,
            in_specs=in_specs,
            out_specs=out_spec,
        ),
        compiler_params=pltpu.CompilerParams(
            dimension_semantics=("parallel", "arbitrary"),
            vmem_limit_bytes=int(vmem_limit)),
    )(x, bias, valid,
      packed['wqkv'], packed['bqkv'], packed['wo'], packed['bo'],
      packed['ln1_g'], packed['ln1_b'],
      packed['w1'], packed['b1'], packed['w2'], packed['b2'],
      packed['ln2_g'], packed['ln2_b'])
    return out[:, :S, :d_model]


def init_encoder_params(key, *, nlayers, d_model, heads, d_k, d_v, d_ff):
    """Deterministic synthetic parameter init (matches GAEncoder shapes;
    Linear layers carry biases like PyTorch nn.Linear)."""
    params = []
    for layer in range(nlayers):
        lk = jax.random.fold_in(key, layer)
        ks = jax.random.split(lk, 6)
        sc = 0.02
        params.append({
            'wq': sc * jax.random.normal(ks[0], (d_model, heads * d_k), jnp.float32),
            'bq': jnp.zeros((heads * d_k,), jnp.float32),
            'wk': sc * jax.random.normal(ks[1], (d_model, heads * d_k), jnp.float32),
            'bk': jnp.zeros((heads * d_k,), jnp.float32),
            'wv': sc * jax.random.normal(ks[2], (d_model, heads * d_v), jnp.float32),
            'bv': jnp.zeros((heads * d_v,), jnp.float32),
            'wo': sc * jax.random.normal(ks[3], (heads * d_v, d_model), jnp.float32),
            'bo': jnp.zeros((d_model,), jnp.float32),
            'ln1_g': jnp.ones((d_model,), jnp.float32),
            'ln1_b': jnp.zeros((d_model,), jnp.float32),
            'w1': sc * jax.random.normal(ks[4], (d_model, d_ff), jnp.float32),
            'b1': jnp.zeros((d_ff,), jnp.float32),
            'w2': sc * jax.random.normal(ks[5], (d_ff, d_model), jnp.float32),
            'b2': jnp.zeros((d_model,), jnp.float32),
            'ln2_g': jnp.ones((d_model,), jnp.float32),
            'ln2_b': jnp.zeros((d_model,), jnp.float32),
        })
    return params


def pack_encoder_params(params, *, d_model, heads, d_k, d_v, d_ff,
                        mxu_dtype=jnp.bfloat16):
    """Stack per-layer weights on a leading layer axis, fuse Wq/Wk/Wv (+bias),
    pad every lane dim (d_model, d_ff, fused QKV width) to a multiple of 128
    with zeros, cast big matrices to the MXU operand dtype."""
    d_pad = _round_up(d_model, 128)
    f_pad = _round_up(d_ff, 128)
    hk, hv = heads * d_k, heads * d_v
    wtot = _round_up(2 * hk + hv, 128)          # lane-dense QKV output width

    def pad2(a, rows, cols):
        return jnp.pad(a, ((0, rows - a.shape[0]), (0, cols - a.shape[1])))

    keys = ('wqkv', 'bqkv', 'wo', 'bo', 'ln1_g', 'ln1_b',
            'w1', 'b1', 'w2', 'b2', 'ln2_g', 'ln2_b')
    acc = {k: [] for k in keys}
    for p in params:
        qkv_w = jnp.concatenate([p['wq'], p['wk'], p['wv']], axis=1)
        qkv_b = jnp.concatenate([p['bq'], p['bk'], p['bv']])[None, :]
        acc['wqkv'].append(pad2(qkv_w, d_pad, wtot).astype(mxu_dtype))
        acc['bqkv'].append(pad2(qkv_b, 1, wtot))
        acc['wo'].append(pad2(p['wo'], hv, d_pad).astype(mxu_dtype))
        acc['bo'].append(pad2(p['bo'][None, :], 1, d_pad))
        acc['ln1_g'].append(pad2(p['ln1_g'][None, :], 1, d_pad))
        acc['ln1_b'].append(pad2(p['ln1_b'][None, :], 1, d_pad))
        acc['w1'].append(pad2(p['w1'], d_pad, f_pad).astype(mxu_dtype))
        acc['b1'].append(pad2(p['b1'][None, :], 1, f_pad))
        acc['w2'].append(pad2(p['w2'], f_pad, d_pad).astype(mxu_dtype))
        acc['b2'].append(pad2(p['b2'][None, :], 1, d_pad))
        acc['ln2_g'].append(pad2(p['ln2_g'][None, :], 1, d_pad))
        acc['ln2_b'].append(pad2(p['ln2_b'][None, :], 1, d_pad))
    return {k: jnp.stack(v, axis=0) for k, v in acc.items()}


if __name__ == "__main__":
    # Small shapes consistent with the module's hyperparameters.
    B, S = 2, 8                # batch, number of nodes / sequence length
    d_model = 32               # input_size
    heads, d_k, d_v = 4, 8, 8  # args.num_head, args.d_k, args.d_v
    d_ff = 64                  # args.d_ff
    nlayers = 2                # args.nlayers

    key = jax.random.PRNGKey(0)
    kh_, kp_ = jax.random.split(key)

    h = jax.random.normal(kh_, (B, S, d_model), jnp.float32)
    # mask: 1 = valid node, 0 = padding (second example has 2 padded nodes)
    mask = jnp.ones((B, 1, S), jnp.float32)
    mask = mask.at[1, 0, S - 2:].set(0.0)

    params = init_encoder_params(kp_, nlayers=nlayers, d_model=d_model,
                                 heads=heads, d_k=d_k, d_v=d_v, d_ff=d_ff)
    packed = pack_encoder_params(params, d_model=d_model, heads=heads,
                                 d_k=d_k, d_v=d_v, d_ff=d_ff,
                                 mxu_dtype=jnp.bfloat16)

    out = encoder_forward(h, mask, packed, heads=heads, d_k=d_k, d_v=d_v,
                          d_model=d_model, nlayers=nlayers,
                          mxu_dtype=jnp.bfloat16)
    out = jax.block_until_ready(out)
    assert out.shape == (B, S, d_model)
    assert bool(jnp.all(jnp.isfinite(out)))
    print("KERNEL_OK")
</pallas_src>

<mosaic_0001>
module attributes {stable_mosaic.version = 11 : i64} {
  func.func @_encoder_kernel(%arg0: i32, %arg1: i32, %arg2: memref<2x8x128xf32, #tpu.memory_space<vmem>>, %arg3: memref<2x1x8xf32, #tpu.memory_space<vmem>>, %arg4: memref<1x128xf32, #tpu.memory_space<vmem>>, %arg5: memref<2x128x128xbf16, #tpu.memory_space<vmem>>, %arg6: memref<2x1x128xf32, #tpu.memory_space<vmem>>, %arg7: memref<2x32x128xbf16, #tpu.memory_space<vmem>>, %arg8: memref<2x1x128xf32, #tpu.memory_space<vmem>>, %arg9: memref<2x1x128xf32, #tpu.memory_space<vmem>>, %arg10: memref<2x1x128xf32, #tpu.memory_space<vmem>>, %arg11: memref<2x128x128xbf16, #tpu.memory_space<vmem>>, %arg12: memref<2x1x128xf32, #tpu.memory_space<vmem>>, %arg13: memref<2x128x128xbf16, #tpu.memory_space<vmem>>, %arg14: memref<2x1x128xf32, #tpu.memory_space<vmem>>, %arg15: memref<2x1x128xf32, #tpu.memory_space<vmem>>, %arg16: memref<2x1x128xf32, #tpu.memory_space<vmem>>, %arg17: memref<2x8x128xf32, #tpu.memory_space<vmem>>) attributes {dimension_semantics = [#tpu.dimension_semantics<parallel>, #tpu.dimension_semantics<arbitrary>], iteration_bounds = array<i64: 1, 2>, scalar_prefetch = 0 : i64, scratch_operands = 0 : i64, tpu.core_type = #tpu.core_type<tc>, window_params = [{transform_indices = @transform_0, window_bounds = array<i64: 2, 8, 128>}, {transform_indices = @transform_1, window_bounds = array<i64: 2, 1, 8>}, {pipeline_mode = #tpu.pipeline_mode<synchronous>, transform_indices = @transform_2, window_bounds = array<i64: 1, 128>}, {pipeline_mode = #tpu.pipeline_mode<synchronous>, transform_indices = @transform_3, window_bounds = array<i64: 2, 128, 128>}, {pipeline_mode = #tpu.pipeline_mode<synchronous>, transform_indices = @transform_4, window_bounds = array<i64: 2, 1, 128>}, {pipeline_mode = #tpu.pipeline_mode<synchronous>, transform_indices = @transform_5, window_bounds = array<i64: 2, 32, 128>}, {pipeline_mode = #tpu.pipeline_mode<synchronous>, transform_indices = @transform_6, window_bounds = array<i64: 2, 1, 128>}, {pipeline_mode = #tpu.pipeline_mode<synchronous>, transform_indices = @transform_7, window_bounds = array<i64: 2, 1, 128>}, {pipeline_mode = #tpu.pipeline_mode<synchronous>, transform_indices = @transform_8, window_bounds = array<i64: 2, 1, 128>}, {pipeline_mode = #tpu.pipeline_mode<synchronous>, transform_indices = @transform_9, window_bounds = array<i64: 2, 128, 128>}, {pipeline_mode = #tpu.pipeline_mode<synchronous>, transform_indices = @transform_10, window_bounds = array<i64: 2, 1, 128>}, {pipeline_mode = #tpu.pipeline_mode<synchronous>, transform_indices = @transform_11, window_bounds = array<i64: 2, 128, 128>}, {pipeline_mode = #tpu.pipeline_mode<synchronous>, transform_indices = @transform_12, window_bounds = array<i64: 2, 1, 128>}, {pipeline_mode = #tpu.pipeline_mode<synchronous>, transform_indices = @transform_13, window_bounds = array<i64: 2, 1, 128>}, {pipeline_mode = #tpu.pipeline_mode<synchronous>, transform_indices = @transform_14, window_bounds = array<i64: 2, 1, 128>}, {transform_indices = @transform_15, window_bounds = array<i64: 2, 8, 128>}]} {
    %c0_i32 = arith.constant 0 : i32
    %0 = arith.cmpi eq, %arg1, %c0_i32 : i32
    %1 = arith.extui %0 : i1 to i32
    %c0_i32_0 = arith.constant 0 : i32
    %2 = arith.cmpi ne, %1, %c0_i32_0 : i32
    scf.if %2 {
      %c0_54 = arith.constant 0 : index
      %c0_55 = arith.constant 0 : index
      %c0_56 = arith.constant 0 : index
      %152 = vector.load %arg2[%c0_54, %c0_55, %c0_56] : memref<2x8x128xf32, #tpu.memory_space<vmem>>, vector<2x8x128xf32>
      %c0_57 = arith.constant 0 : index
      %c0_58 = arith.constant 0 : index
      %c0_59 = arith.constant 0 : index
      %153 = vector.load %arg17[%c0_57, %c0_58, %c0_59] : memref<2x8x128xf32, #tpu.memory_space<vmem>>, vector<2x8x128xf32>
      tpu.vector_store %arg17[%c0_57, %c0_58, %c0_59], %152 {strides = array<i32>} : memref<2x8x128xf32, #tpu.memory_space<vmem>>, vector<2x8x128xf32>,
    } else {
    }
    %c0 = arith.constant 0 : index
    %c0_1 = arith.constant 0 : index
    %c0_2 = arith.constant 0 : index
    %3 = vector.load %arg17[%c0, %c0_1, %c0_2] : memref<2x8x128xf32, #tpu.memory_space<vmem>>, vector<2x8x128xf32>
    %4 = vector.shape_cast %3 : vector<2x8x128xf32> to vector<16x128xf32>
    %c0_3 = arith.constant 0 : index
    %c0_4 = arith.constant 0 : index
    %5 = vector.load %arg4[%c0_3, %c0_4] : memref<1x128xf32, #tpu.memory_space<vmem>>, vector<1x128xf32>
    %6 = arith.truncf %4 : vector<16x128xf32> to vector<16x128xbf16>
    %7 = arith.index_cast %arg1 : i32 to index
    %c0_5 = arith.constant 0 : index
    %c0_6 = arith.constant 0 : index
    %8 = vector.load %arg5[%7, %c0_5, %c0_6] : memref<2x128x128xbf16, #tpu.memory_space<vmem>>, vector<1x128x128xbf16>
    %9 = vector.shape_cast %8 : vector<1x128x128xbf16> to vector<128x128xbf16>
    %cst = arith.constant dense<0.000000e+00> : vector<16x128xf32>
    %10 = tpu.matmul %6, %9, %cst {dimension_numbers = #tpu.dot_dimension_numbers<[1], [0], [0], [1], [0, 0, 1, 1], [], []>} : vector<16x128xbf16>, vector<128x128xbf16>, vector<16x128xf32> -> vector<16x128xf32>
    %11 = arith.index_cast %arg1 : i32 to index
    %c0_7 = arith.constant 0 : index
    %c0_8 = arith.constant 0 : index
    %12 = vector.load %arg6[%11, %c0_7, %c0_8] : memref<2x1x128xf32, #tpu.memory_space<vmem>>, vector<1x1x128xf32>
    %13 = vector.shape_cast %12 : vector<1x1x128xf32> to vector<1x128xf32>
    %14 = vector.broadcast %13 : vector<1x128xf32> to vector<16x128xf32>
    %15 = arith.addf %10, %14 : vector<16x128xf32>
    %16 = vector.shape_cast %15 : vector<16x128xf32> to vector<2x8x128xf32>
    %17 = arith.truncf %16 : vector<2x8x128xf32> to vector<2x8x128xbf16>
    %18 = vector.extract_strided_slice %17 {offsets = [0, 0, 0], sizes = [2, 8, 8], strides = [1, 1, 1]} : vector<2x8x128xbf16> to vector<2x8x8xbf16>
    %19 = vector.extract_strided_slice %17 {offsets = [0, 0, 8], sizes = [2, 8, 8], strides = [1, 1, 1]} : vector<2x8x128xbf16> to vector<2x8x8xbf16>
    %20 = vector.extract_strided_slice %17 {offsets = [0, 0, 16], sizes = [2, 8, 8], strides = [1, 1, 1]} : vector<2x8x128xbf16> to vector<2x8x8xbf16>
    %21 = vector.extract_strided_slice %17 {offsets = [0, 0, 24], sizes = [2, 8, 8], strides = [1, 1, 1]} : vector<2x8x128xbf16> to vector<2x8x8xbf16>
    %22 = tpu.concatenate %18, %19, %20, %21 in 0 : vector<2x8x8xbf16>, vector<2x8x8xbf16>, vector<2x8x8xbf16>, vector<2x8x8xbf16> -> vector<8x8x8xbf16>
    %23 = vector.extract_strided_slice %17 {offsets = [0, 0, 32], sizes = [2, 8, 8], strides = [1, 1, 1]} : vector<2x8x128xbf16> to vector<2x8x8xbf16>
    %24 = vector.extract_strided_slice %17 {offsets = [0, 0, 40], sizes = [2, 8, 8], strides = [1, 1, 1]} : vector<2x8x128xbf16> to vector<2x8x8xbf16>
    %25 = vector.extract_strided_slice %17 {offsets = [0, 0, 48], sizes = [2, 8, 8], strides = [1, 1, 1]} : vector<2x8x128xbf16> to vector<2x8x8xbf16>
    %26 = vector.extract_strided_slice %17 {offsets = [0, 0, 56], sizes = [2, 8, 8], strides = [1, 1, 1]} : vector<2x8x128xbf16> to vector<2x8x8xbf16>
    %27 = tpu.concatenate %23, %24, %25, %26 in 0 : vector<2x8x8xbf16>, vector<2x8x8xbf16>, vector<2x8x8xbf16>, vector<2x8x8xbf16> -> vector<8x8x8xbf16>
    %28 = vector.extract_strided_slice %17 {offsets = [0, 0, 64], sizes = [2, 8, 8], strides = [1, 1, 1]} : vector<2x8x128xbf16> to vector<2x8x8xbf16>
    %29 = vector.extract_strided_slice %17 {offsets = [0, 0, 72], sizes = [2, 8, 8], strides = [1, 1, 1]} : vector<2x8x128xbf16> to vector<2x8x8xbf16>
    %30 = vector.extract_strided_slice %17 {offsets = [0, 0, 80], sizes = [2, 8, 8], strides = [1, 1, 1]} : vector<2x8x128xbf16> to vector<2x8x8xbf16>
    %31 = vector.extract_strided_slice %17 {offsets = [0, 0, 88], sizes = [2, 8, 8], strides = [1, 1, 1]} : vector<2x8x128xbf16> to vector<2x8x8xbf16>
    %32 = tpu.concatenate %28, %29, %30, %31 in 0 : vector<2x8x8xbf16>, vector<2x8x8xbf16>, vector<2x8x8xbf16>, vector<2x8x8xbf16> -> vector<8x8x8xbf16>
    "tpu.trace_start"() <{level = 10 : i32, message = "bqd,bkd->bqk"}> : () -> ()
    %cst_9 = arith.constant dense<0.000000e+00> : vector<8x8x8xf32>
    %33 = tpu.matmul %22, %27, %cst_9 {dimension_numbers = #tpu.dot_dimension_numbers<[2], [2], [1], [1], [0, 0, 0, 1, 1, 1], [0], [0]>} : vector<8x8x8xbf16>, vector<8x8x8xbf16>, vector<8x8x8xf32> -> vector<8x8x8xf32>
    "tpu.trace_stop"() : () -> ()
    %cst_10 = arith.constant 0.353553385 : f32
    %34 = vector.broadcast %cst_10 : f32 to vector<8x8x8xf32>
    %35 = arith.mulf %33, %34 : vector<8x8x8xf32>
    %36 = vector.shape_cast %35 : vector<8x8x8xf32> to vector<4x2x8x8xf32>
    %c0_11 = arith.constant 0 : index
    %c0_12 = arith.constant 0 : index
    %c0_13 = arith.constant 0 : index
    %37 = vector.load %arg3[%c0_11, %c0_12, %c0_13] : memref<2x1x8xf32, #tpu.memory_space<vmem>>, vector<2x1x8xf32>
    %38 = vector.shape_cast %37 : vector<2x1x8xf32> to vector<1x2x1x8xf32>
    %39 = vector.broadcast %38 : vector<1x2x1x8xf32> to vector<4x2x8x8xf32>
    %40 = arith.addf %36, %39 : vector<4x2x8x8xf32>
    %cst_14 = arith.constant dense<0xFF800000> : vector<4x2x8xf32>
    %41 = vector.multi_reduction <maximumf>, %40, %cst_14 [3] : vector<4x2x8x8xf32> to vector<4x2x8xf32>
    %42 = vector.shape_cast %41 : vector<4x2x8xf32> to vector<4x2x8x1xf32>
    %43 = vector.broadcast %42 : vector<4x2x8x1xf32> to vector<4x2x8x8xf32>
    %44 = arith.subf %40, %43 : vector<4x2x8x8xf32>
    %45 = math.exp %44 : vector<4x2x8x8xf32>
    %cst_15 = arith.constant dense<0.000000e+00> : vector<4x2x8xf32>
    %46 = vector.multi_reduction <add>, %45, %cst_15 [3] : vector<4x2x8x8xf32> to vector<4x2x8xf32>
    %47 = vector.shape_cast %46 : vector<4x2x8xf32> to vector<4x2x8x1xf32>
    %48 = tpu.reciprocal %47 {approx = true} : vector<4x2x8x1xf32> -> vector<4x2x8x1xf32>
    %49 = vector.broadcast %48 : vector<4x2x8x1xf32> to vector<4x2x8x8xf32>
    %50 = arith.mulf %45, %49 : vector<4x2x8x8xf32>
    %51 = vector.shape_cast %50 : vector<4x2x8x8xf32> to vector<8x8x8xf32>
    %52 = arith.truncf %51 : vector<8x8x8xf32> to vector<8x8x8xbf16>
    "tpu.trace_start"() <{level = 10 : i32, message = "bqk,bkd->bqd"}> : () -> ()
    %cst_16 = arith.constant dense<0.000000e+00> : vector<8x8x8xf32>
    %53 = tpu.matmul %52, %32, %cst_16 {dimension_numbers = #tpu.dot_dimension_numbers<[2], [1], [1], [2], [0, 0, 0, 1, 1, 2], [0], [0]>} : vector<8x8x8xbf16>, vector<8x8x8xbf16>, vector<8x8x8xf32> -> vector<8x8x8xf32>
    "tpu.trace_stop"() : () -> ()
    %54 = vector.extract_strided_slice %53 {offsets = [0, 0, 0], sizes = [2, 8, 8], strides = [1, 1, 1]} : vector<8x8x8xf32> to vector<2x8x8xf32>
    %55 = vector.extract_strided_slice %53 {offsets = [2, 0, 0], sizes = [2, 8, 8], strides = [1, 1, 1]} : vector<8x8x8xf32> to vector<2x8x8xf32>
    %56 = vector.extract_strided_slice %53 {offsets = [4, 0, 0], sizes = [2, 8, 8], strides = [1, 1, 1]} : vector<8x8x8xf32> to vector<2x8x8xf32>
    %57 = vector.extract_strided_slice %53 {offsets = [6, 0, 0], sizes = [2, 8, 8], strides = [1, 1, 1]} : vector<8x8x8xf32> to vector<2x8x8xf32>
    %58 = tpu.concatenate %54, %55, %56, %57 in 2 : vector<2x8x8xf32>, vector<2x8x8xf32>, vector<2x8x8xf32>, vector<2x8x8xf32> -> vector<2x8x32xf32>
    %59 = vector.shape_cast %58 : vector<2x8x32xf32> to vector<16x32xf32>
    %60 = arith.truncf %59 : vector<16x32xf32> to vector<16x32xbf16>
    %61 = arith.index_cast %arg1 : i32 to index
    %c0_17 = arith.constant 0 : index
    %c0_18 = arith.constant 0 : index
    %62 = vector.load %arg7[%61, %c0_17, %c0_18] : memref<2x32x128xbf16, #tpu.memory_space<vmem>>, vector<1x32x128xbf16>
    %63 = vector.shape_cast %62 : vector<1x32x128xbf16> to vector<32x128xbf16>
    %cst_19 = arith.constant dense<0.000000e+00> : vector<16x128xf32>
    %64 = tpu.matmul %60, %63, %cst_19 {dimension_numbers = #tpu.dot_dimension_numbers<[1], [0], [0], [1], [0, 0, 1, 1], [], []>} : vector<16x32xbf16>, vector<32x128xbf16>, vector<16x128xf32> -> vector<16x128xf32>
    %65 = arith.index_cast %arg1 : i32 to index
    %c0_20 = arith.constant 0 : index
    %c0_21 = arith.constant 0 : index
    %66 = vector.load %arg8[%65, %c0_20, %c0_21] : memref<2x1x128xf32, #tpu.memory_space<vmem>>, vector<1x1x128xf32>
    %67 = vector.shape_cast %66 : vector<1x1x128xf32> to vector<1x128xf32>
    %68 = vector.broadcast %67 : vector<1x128xf32> to vector<16x128xf32>
    %69 = arith.addf %64, %68 : vector<16x128xf32>
    %70 = arith.addf %4, %69 : vector<16x128xf32>
    %71 = arith.index_cast %arg1 : i32 to index
    %c0_22 = arith.constant 0 : index
    %c0_23 = arith.constant 0 : index
    %72 = vector.load %arg9[%71, %c0_22, %c0_23] : memref<2x1x128xf32, #tpu.memory_space<vmem>>, vector<1x1x128xf32>
    %73 = vector.shape_cast %72 : vector<1x1x128xf32> to vector<1x128xf32>
    %74 = arith.index_cast %arg1 : i32 to index
    %c0_24 = arith.constant 0 : index
    %c0_25 = arith.constant 0 : index
    %75 = vector.load %arg10[%74, %c0_24, %c0_25] : memref<2x1x128xf32, #tpu.memory_space<vmem>>, vector<1x1x128xf32>
    %76 = vector.shape_cast %75 : vector<1x1x128xf32> to vector<1x128xf32>
    %cst_26 = arith.constant dense<0.000000e+00> : vector<16xf32>
    %77 = vector.multi_reduction <add>, %70, %cst_26 [1] : vector<16x128xf32> to vector<16xf32>
    %78 = vector.shape_cast %77 : vector<16xf32> to vector<16x1xf32>
    %cst_27 = arith.constant 3.125000e-02 : f32
    %79 = vector.broadcast %cst_27 : f32 to vector<16x1xf32>
    %80 = arith.mulf %78, %79 : vector<16x1xf32>
    %81 = vector.broadcast %80 : vector<16x1xf32> to vector<16x128xf32>
    %82 = arith.subf %70, %81 : vector<16x128xf32>
    %83 = vector.broadcast %5 : vector<1x128xf32> to vector<16x128xf32>
    %84 = arith.mulf %82, %83 : vector<16x128xf32>
    %85 = arith.mulf %84, %84 : vector<16x128xf32>
    %cst_28 = arith.constant dense<0.000000e+00> : vector<16xf32>
    %86 = vector.multi_reduction <add>, %85, %cst_28 [1] : vector<16x128xf32> to vector<16xf32>
    %87 = vector.shape_cast %86 : vector<16xf32> to vector<16x1xf32>
    %cst_29 = arith.constant 3.125000e-02 : f32
    %88 = vector.broadcast %cst_29 : f32 to vector<16x1xf32>
    %89 = arith.mulf %87, %88 : vector<16x1xf32>
    %cst_30 = arith.constant 9.99999974E-6 : f32
    %90 = vector.broadcast %cst_30 : f32 to vector<16x1xf32>
    %91 = arith.addf %89, %90 : vector<16x1xf32>
    %92 = math.rsqrt %91 : vector<16x1xf32>
    %93 = vector.broadcast %92 : vector<16x1xf32> to vector<16x128xf32>
    %94 = arith.mulf %84, %93 : vector<16x128xf32>
    %95 = vector.broadcast %73 : vector<1x128xf32> to vector<16x128xf32>
    %96 = arith.mulf %94, %95 : vector<16x128xf32>
    %97 = vector.broadcast %76 : vector<1x128xf32> to vector<16x128xf32>
    %98 = arith.addf %96, %97 : vector<16x128xf32>
    %99 = arith.truncf %98 : vector<16x128xf32> to vector<16x128xbf16>
    %100 = arith.index_cast %arg1 : i32 to index
    %c0_31 = arith.constant 0 : index
    %c0_32 = arith.constant 0 : index
    %101 = vector.load %arg11[%100, %c0_31, %c0_32] : memref<2x128x128xbf16, #tpu.memory_space<vmem>>, vector<1x128x128xbf16>
    %102 = vector.shape_cast %101 : vector<1x128x128xbf16> to vector<128x128xbf16>
    %cst_33 = arith.constant dense<0.000000e+00> : vector<16x128xf32>
    %103 = tpu.matmul %99, %102, %cst_33 {dimension_numbers = #tpu.dot_dimension_numbers<[1], [0], [0], [1], [0, 0, 1, 1], [], []>} : vector<16x128xbf16>, vector<128x128xbf16>, vector<16x128xf32> -> vector<16x128xf32>
    %104 = arith.index_cast %arg1 : i32 to index
    %c0_34 = arith.constant 0 : index
    %c0_35 = arith.constant 0 : index
    %105 = vector.load %arg12[%104, %c0_34, %c0_35] : memref<2x1x128xf32, #tpu.memory_space<vmem>>, vector<1x1x128xf32>
    %106 = vector.shape_cast %105 : vector<1x1x128xf32> to vector<1x128xf32>
    %107 = vector.broadcast %106 : vector<1x128xf32> to vector<16x128xf32>
    %108 = arith.addf %103, %107 : vector<16x128xf32>
    %cst_36 = arith.constant 0.000000e+00 : f32
    %109 = vector.broadcast %cst_36 : f32 to vector<16x128xf32>
    %110 = arith.maximumf %108, %109 : vector<16x128xf32>
    %111 = arith.truncf %110 : vector<16x128xf32> to vector<16x128xbf16>
    %112 = arith.index_cast %arg1 : i32 to index
    %c0_37 = arith.constant 0 : index
    %c0_38 = arith.constant 0 : index
    %113 = vector.load %arg13[%112, %c0_37, %c0_38] : memref<2x128x128xbf16, #tpu.memory_space<vmem>>, vector<1x128x128xbf16>
    %114 = vector.shape_cast %113 : vector<1x128x128xbf16> to vector<128x128xbf16>
    %cst_39 = arith.constant dense<0.000000e+00> : vector<16x128xf32>
    %115 = tpu.matmul %111, %114, %cst_39 {dimension_numbers = #tpu.dot_dimension_numbers<[1], [0], [0], [1], [0, 0, 1, 1], [], []>} : vector<16x128xbf16>, vector<128x128xbf16>, vector<16x128xf32> -> vector<16x128xf32>
    %116 = arith.index_cast %arg1 : i32 to index
    %c0_40 = arith.constant 0 : index
    %c0_41 = arith.constant 0 : index
    %117 = vector.load %arg14[%116, %c0_40, %c0_41] : memref<2x1x128xf32, #tpu.memory_space<vmem>>, vector<1x1x128xf32>
    %118 = vector.shape_cast %117 : vector<1x1x128xf32> to vector<1x128xf32>
    %119 = vector.broadcast %118 : vector<1x128xf32> to vector<16x128xf32>
    %120 = arith.addf %115, %119 : vector<16x128xf32>
    %121 = arith.addf %98, %120 : vector<16x128xf32>
    %122 = arith.index_cast %arg1 : i32 to index
    %c0_42 = arith.constant 0 : index
    %c0_43 = arith.constant 0 : index
    %123 = vector.load %arg15[%122, %c0_42, %c0_43] : memref<2x1x128xf32, #tpu.memory_space<vmem>>, vector<1x1x128xf32>
    %124 = vector.shape_cast %123 : vector<1x1x128xf32> to vector<1x128xf32>
    %125 = arith.index_cast %arg1 : i32 to index
    %c0_44 = arith.constant 0 : index
    %c0_45 = arith.constant 0 : index
    %126 = vector.load %arg16[%125, %c0_44, %c0_45] : memref<2x1x128xf32, #tpu.memory_space<vmem>>, vector<1x1x128xf32>
    %127 = vector.shape_cast %126 : vector<1x1x128xf32> to vector<1x128xf32>
    %cst_46 = arith.constant dense<0.000000e+00> : vector<16xf32>
    %128 = vector.multi_reduction <add>, %121, %cst_46 [1] : vector<16x128xf32> to vector<16xf32>
    %129 = vector.shape_cast %128 : vector<16xf32> to vector<16x1xf32>
    %cst_47 = arith.constant 3.125000e-02 : f32
    %130 = vector.broadcast %cst_47 : f32 to vector<16x1xf32>
    %131 = arith.mulf %129, %130 : vector<16x1xf32>
    %132 = vector.broadcast %131 : vector<16x1xf32> to vector<16x128xf32>
    %133 = arith.subf %121, %132 : vector<16x128xf32>
    %134 = vector.broadcast %5 : vector<1x128xf32> to vector<16x128xf32>
    %135 = arith.mulf %133, %134 : vector<16x128xf32>
    %136 = arith.mulf %135, %135 : vector<16x128xf32>
    %cst_48 = arith.constant dense<0.000000e+00> : vector<16xf32>
    %137 = vector.multi_reduction <add>, %136, %cst_48 [1] : vector<16x128xf32> to vector<16xf32>
    %138 = vector.shape_cast %137 : vector<16xf32> to vector<16x1xf32>
    %cst_49 = arith.constant 3.125000e-02 : f32
    %139 = vector.broadcast %cst_49 : f32 to vector<16x1xf32>
    %140 = arith.mulf %138, %139 : vector<16x1xf32>
    %cst_50 = arith.constant 9.99999974E-6 : f32
    %141 = vector.broadcast %cst_50 : f32 to vector<16x1xf32>
    %142 = arith.addf %140, %141 : vector<16x1xf32>
    %143 = math.rsqrt %142 : vector<16x1xf32>
    %144 = vector.broadcast %143 : vector<16x1xf32> to vector<16x128xf32>
    %145 = arith.mulf %135, %144 : vector<16x128xf32>
    %146 = vector.broadcast %124 : vector<1x128xf32> to vector<16x128xf32>
    %147 = arith.mulf %145, %146 : vector<16x128xf32>
    %148 = vector.broadcast %127 : vector<1x128xf32> to vector<16x128xf32>
    %149 = arith.addf %147, %148 : vector<16x128xf32>
    %150 = vector.shape_cast %149 : vector<16x128xf32> to vector<2x8x128xf32>
    %c0_51 = arith.constant 0 : index
    %c0_52 = arith.constant 0 : index
    %c0_53 = arith.constant 0 : index
    %151 = vector.load %arg17[%c0_51, %c0_52, %c0_53] : memref<2x8x128xf32, #tpu.memory_space<vmem>>, vector<2x8x128xf32>
    tpu.vector_store %arg17[%c0_51, %c0_52, %c0_53], %150 {strides = array<i32>} : memref<2x8x128xf32, #tpu.memory_space<vmem>>, vector<2x8x128xf32>,
    return
  }
  func.func @transform_0(%arg0: i32, %arg1: i32) -> (i32, i32, i32) {
    %c0_i32 = arith.constant 0 : i32
    %c0_i32_0 = arith.constant 0 : i32
    %c0_i32_1 = arith.constant 0 : i32
    return %arg0, %c0_i32, %c0_i32_0 : i32, i32, i32
  }
  func.func @transform_1(%arg0: i32, %arg1: i32) -> (i32, i32, i32) {
    %c0_i32 = arith.constant 0 : i32
    %c0_i32_0 = arith.constant 0 : i32
    %c0_i32_1 = arith.constant 0 : i32
    return %arg0, %c0_i32, %c0_i32_0 : i32, i32, i32
  }
  func.func @transform_2(%arg0: i32, %arg1: i32) -> (i32, i32) {
    %c0_i32 = arith.constant 0 : i32
    %c0_i32_0 = arith.constant 0 : i32
    %c0_i32_1 = arith.constant 0 : i32
    return %c0_i32, %c0_i32_0 : i32, i32
  }
  func.func @transform_3(%arg0: i32, %arg1: i32) -> (i32, i32, i32) {
    %c0_i32 = arith.constant 0 : i32
    %c0_i32_0 = arith.constant 0 : i32
    %c0_i32_1 = arith.constant 0 : i32
    %c0_i32_2 = arith.constant 0 : i32
    return %c0_i32, %c0_i32_0, %c0_i32_1 : i32, i32, i32
  }
  func.func @transform_4(%arg0: i32, %arg1: i32) -> (i32, i32, i32) {
    %c0_i32 = arith.constant 0 : i32
    %c0_i32_0 = arith.constant 0 : i32
    %c0_i32_1 = arith.constant 0 : i32
    %c0_i32_2 = arith.constant 0 : i32
    return %c0_i32, %c0_i32_0, %c0_i32_1 : i32, i32, i32
  }
  func.func @transform_5(%arg0: i32, %arg1: i32) -> (i32, i32, i32) {
    %c0_i32 = arith.constant 0 : i32
    %c0_i32_0 = arith.constant 0 : i32
    %c0_i32_1 = arith.constant 0 : i32
    %c0_i32_2 = arith.constant 0 : i32
    return %c0_i32, %c0_i32_0, %c0_i32_1 : i32, i32, i32
  }
  func.func @transform_6(%arg0: i32, %arg1: i32) -> (i32, i32, i32) {
    %c0_i32 = arith.constant 0 : i32
    %c0_i32_0 = arith.constant 0 : i32
    %c0_i32_1 = arith.constant 0 : i32
    %c0_i32_2 = arith.constant 0 : i32
    return %c0_i32, %c0_i32_0, %c0_i32_1 : i32, i32, i32
  }
  func.func @transform_7(%arg0: i32, %arg1: i32) -> (i32, i32, i32) {
    %c0_i32 = arith.constant 0 : i32
    %c0_i32_0 = arith.constant 0 : i32
    %c0_i32_1 = arith.constant 0 : i32
    %c0_i32_2 = arith.constant 0 : i32
    return %c0_i32, %c0_i32_0, %c0_i32_1 : i32, i32, i32
  }
  func.func @transform_8(%arg0: i32, %arg1: i32) -> (i32, i32, i32) {
    %c0_i32 = arith.constant 0 : i32
    %c0_i32_0 = arith.constant 0 : i32
    %c0_i32_1 = arith.constant 0 : i32
    %c0_i32_2 = arith.constant 0 : i32
    return %c0_i32, %c0_i32_0, %c0_i32_1 : i32, i32, i32
  }
  func.func @transform_9(%arg0: i32, %arg1: i32) -> (i32, i32, i32) {
    %c0_i32 = arith.constant 0 : i32
    %c0_i32_0 = arith.constant 0 : i32
    %c0_i32_1 = arith.constant 0 : i32
    %c0_i32_2 = arith.constant 0 : i32
    return %c0_i32, %c0_i32_0, %c0_i32_1 : i32, i32, i32
  }
  func.func @transform_10(%arg0: i32, %arg1: i32) -> (i32, i32, i32) {
    %c0_i32 = arith.constant 0 : i32
    %c0_i32_0 = arith.constant 0 : i32
    %c0_i32_1 = arith.constant 0 : i32
    %c0_i32_2 = arith.constant 0 : i32
    return %c0_i32, %c0_i32_0, %c0_i32_1 : i32, i32, i32
  }
  func.func @transform_11(%arg0: i32, %arg1: i32) -> (i32, i32, i32) {
    %c0_i32 = arith.constant 0 : i32
    %c0_i32_0 = arith.constant 0 : i32
    %c0_i32_1 = arith.constant 0 : i32
    %c0_i32_2 = arith.constant 0 : i32
    return %c0_i32, %c0_i32_0, %c0_i32_1 : i32, i32, i32
  }
  func.func @transform_12(%arg0: i32, %arg1: i32) -> (i32, i32, i32) {
    %c0_i32 = arith.constant 0 : i32
    %c0_i32_0 = arith.constant 0 : i32
    %c0_i32_1 = arith.constant 0 : i32
    %c0_i32_2 = arith.constant 0 : i32
    return %c0_i32, %c0_i32_0, %c0_i32_1 : i32, i32, i32
  }
  func.func @transform_13(%arg0: i32, %arg1: i32) -> (i32, i32, i32) {
    %c0_i32 = arith.constant 0 : i32
    %c0_i32_0 = arith.constant 0 : i32
    %c0_i32_1 = arith.constant 0 : i32
    %c0_i32_2 = arith.constant 0 : i32
    return %c0_i32, %c0_i32_0, %c0_i32_1 : i32, i32, i32
  }
  func.func @transform_14(%arg0: i32, %arg1: i32) -> (i32, i32, i32) {
    %c0_i32 = arith.constant 0 : i32
    %c0_i32_0 = arith.constant 0 : i32
    %c0_i32_1 = arith.constant 0 : i32
    %c0_i32_2 = arith.constant 0 : i32
    return %c0_i32, %c0_i32_0, %c0_i32_1 : i32, i32, i32
  }
  func.func @transform_15(%arg0: i32, %arg1: i32) -> (i32, i32, i32) {
    %c0_i32 = arith.constant 0 : i32
    %c0_i32_0 = arith.constant 0 : i32
    %c0_i32_1 = arith.constant 0 : i32
    return %arg0, %c0_i32, %c0_i32_0 : i32, i32, i32
  }
}

</mosaic_0001>

<llo_original>
// kernel: tpu_custom_call.1
$region0: #{tpu_custom_call.1}
  #allocation0 [shape = 'u32[]', space=smem, size = 0x4, offset = 0x4, fixed_abs, tag = 'smem constant byte address 0x4 - core index']
  #allocation1 [shape = 'u32[72,128]{1,0:T(1,128)}', space=vmem, size = 0x9000, scoped, tag = 'internal scratch']
  %s0 = inlined_call_operand.hbm [shape: f32[2,8,128], index: 0, kind: input, shape index: {}]
  %s1 = inlined_call_operand.hbm [shape: f32[2,1,8], index: 1, kind: input, shape index: {}]
  %s2 = inlined_call_operand.hbm [shape: f32[1,128], index: 2, kind: input, shape index: {}]
  %s3 = inlined_call_operand.hbm [shape: bf16[2,128,128], index: 3, kind: input, shape index: {}]
  %s4 = inlined_call_operand.vmem [shape: f32[2,1,128], index: 4, kind: input, shape index: {}]
  %s5 = inlined_call_operand.hbm [shape: bf16[2,32,128], index: 5, kind: input, shape index: {}]
  %s6 = inlined_call_operand.vmem [shape: f32[2,1,128], index: 6, kind: input, shape index: {}]
  %s7 = inlined_call_operand.vmem [shape: f32[2,1,128], index: 7, kind: input, shape index: {}]
  %s8 = inlined_call_operand.hbm [shape: f32[2,1,128], index: 8, kind: input, shape index: {}]
  %s9 = inlined_call_operand.hbm [shape: bf16[2,128,128], index: 9, kind: input, shape index: {}]
  %s10 = inlined_call_operand.vmem [shape: f32[2,1,128], index: 10, kind: input, shape index: {}]
  %s11 = inlined_call_operand.hbm [shape: bf16[2,128,128], index: 11, kind: input, shape index: {}]
  %s12 = inlined_call_operand.vmem [shape: f32[2,1,128], index: 12, kind: input, shape index: {}]
  %s13 = inlined_call_operand.vmem [shape: f32[2,1,128], index: 13, kind: input, shape index: {}]
  %s14 = inlined_call_operand.hbm [shape: f32[2,1,128], index: 14, kind: input, shape index: {}]
  %s15 = inlined_call_operand.hbm [shape: f32[2,8,128], index: 15, kind: output, shape index: {}]
  %s16 = sld [smem:[#allocation0]]
  $region133: #{tpu_custom_call.1} parent=0
    _
  %s18 = ssub.s32 1, %s16
  %s19 = scalar_select 0, %s18, %s16
  $region1: #{tpu_custom_call.1} parent=0
    #allocation2 [shape = 'u8[8192]{0}', space=vmem, size = 0x2000, scoped, tag = 'input window, operand 0, single buffered']
    #allocation3 [shape = 's32[2]{0}', space=sflag, size = 0x8, scoped, tag = 'scoped memory for tpu_custom_call.1']
    #allocation4 [shape = 's32[2]{0}', space=sflag, size = 0x8, scoped, tag = 'scoped memory for tpu_custom_call.1']
    #allocation5 [shape = 'u8[1024]{0}', space=vmem, size = 0x400, scoped, tag = 'input window, operand 1, single buffered']
    #allocation6 [shape = 's32[1]{0}', space=sflag, size = 0x4, scoped, tag = 'scoped memory for tpu_custom_call.1']
    #allocation7 [shape = 'u8[512]{0}', space=vmem, size = 0x400, scoped, tag = 'input window, operand 2, single buffered']
    #allocation8 [shape = 'u8[65536]{0}', space=vmem, size = 0x10000, scoped, tag = 'input window, operand 3, single buffered']
    #allocation9 [shape = 's32[1]{0}', space=sflag, size = 0x4, scoped, tag = 'scoped memory for tpu_custom_call.1']
    #allocation10 [shape = 'u8[16384]{0}', space=vmem, size = 0x4000, scoped, tag = 'input window, operand 5, single buffered']
    #allocation11 [shape = 'u8[1024]{0}', space=vmem, size = 0x400, scoped, tag = 'input window, operand 8, single buffered']
    #allocation12 [shape = 's32[1]{0}', space=sflag, size = 0x4, scoped, tag = 'scoped memory for tpu_custom_call.1']
    #allocation13 [shape = 'u8[65536]{0}', space=vmem, size = 0x10000, scoped, tag = 'input window, operand 9, single buffered']
    #allocation14 [shape = 'u8[65536]{0}', space=vmem, size = 0x10000, scoped, tag = 'input window, operand 11, single buffered']
    #allocation15 [shape = 's32[1]{0}', space=sflag, size = 0x4, scoped, tag = 'scoped memory for tpu_custom_call.1']
    #allocation16 [shape = 'u8[1024]{0}', space=vmem, size = 0x400, scoped, tag = 'input window, operand 14, single buffered']
    #allocation17 [shape = 'u8[8192]{0}', space=vmem, size = 0x2000, scoped, tag = 'output window, operand 0, single buffered']
    %20 = vsyncpa [#allocation3], 0
    %21 = vsyncpa [#allocation6], 0
    %22 = vsyncpa [#allocation9], 0
    %23 = vsyncpa [#allocation12], 0
    %24 = vsyncpa [#allocation15], 0
    %25 = vsyncpa [#allocation4], 0
    loop: start=0, step=1, limit=4
    $region2: #{tpu_custom_call.1} parent=1 // loop_pre_header
      _
    $region3: #{tpu_custom_call.1} parent=1 // loop_header
      %s27 = sphi 0, %s31
      %p28 = scmp.ge.s32.totalorder %s27, 4
      %s34 = sphi 0, %s46
      %s35 = sphi 0, %s42
      %s36 = sphi 0, %s34
      %s37 = sphi 0, %s35
      %s38 = sphi 0, %s36
      %s39 = sphi 0, %s37
      %s49 = sphi 0, %s51
      %s52 = sphi 0, %s49
      %s53 = sphi 0, %s52
      %s69 = sphi 0, %s53
      %s75 = sphi 0, %s77
      %s78 = sphi 0, %s75
      %s79 = sphi 0, %s78
      %s95 = sphi 0, %s79
      %s99 = sphi 0, %s99
      %s101 = sphi 0, %s99
      %s102 = sphi 0, %s101
      %s116 = sphi 0, %s102
      %s120 = sphi 0, %s120
      %s122 = sphi 0, %s120
      %s123 = sphi 0, %s122
      %s137 = sphi 0, %s123
      %s141 = sphi 0, %s141
      %s143 = sphi 0, %s141
      %s144 = sphi 0, %s143
      %s158 = sphi 0, %s144
      %s162 = sphi 0, %s162
      %s164 = sphi 0, %s162
      %s165 = sphi 0, %s164
      %s179 = sphi 0, %s165
      %s183 = sphi 0, %s183
      %s185 = sphi 0, %s183
      %s186 = sphi 0, %s185
      %s200 = sphi 0, %s186
      %s204 = sphi 0, %s204
      %s206 = sphi 0, %s204
      %s207 = sphi 0, %s206
      %s221 = sphi 0, %s207
      %s225 = sphi 0, %s225
      %s227 = sphi 0, %s225
      %s228 = sphi 0, %s227
      %s242 = sphi 0, %s228
      %s246 = sphi 0, %s246
      %s248 = sphi 0, %s246
      %s249 = sphi 0, %s248
      %s263 = sphi 0, %s249
      %s267 = sphi 0, %s267
      %s269 = sphi 0, %s267
      %s270 = sphi 0, %s269
      %s284 = sphi 0, %s270
      %s288 = sphi 0, %s288
      %s290 = sphi 0, %s288
      %s291 = sphi 0, %s290
      %s305 = sphi 0, %s291
      %s309 = sphi 0, %s309
      %s311 = sphi 0, %s309
      %s312 = sphi 0, %s311
      %s326 = sphi 0, %s312
      %s330 = sphi 0, %s330
      %s332 = sphi 0, %s330
      %s333 = sphi 0, %s332
      %s347 = sphi 0, %s333
      %s351 = sphi 0, %s351
      %s353 = sphi 0, %s351
      %s354 = sphi 0, %s353
      %s368 = sphi 0, %s354
      %s374 = sphi 0, %s376
      %s377 = sphi 0, %s374
      %s378 = sphi 0, %s377
      %s394 = sphi 0, %s378
    $region4: #{tpu_custom_call.1} parent=1 // loop_header_branch
      %30 = sbr.rel (%p28) target = $region8
    $region5: #{tpu_custom_call.1} parent=1 // loop_body
      %s32 = ssub.s32 %s27, 1
      %s33 = ssub.s32 %s27, 2
      %s40 = sadd.s32 1, %s35
      %p41 = scmp.ge.s32.totalorder %s40, 2
      %s42 = scalar_select %p41, 0, %s40
      %s43 = sadd.s32 1, %s34
      %s44 = scalar_select %p41, %s43, %s34
      %p45 = scmp.ge.s32.totalorder %s44, 1
      %s46 = scalar_select %p45, 0, %s44
      %s47 = ssub.s32 %s34, %s46
      %p48 = scmp.eq.s32.totalorder %s47, 0
      %s50 = sadd.s32 %s49, 1
      %s51 = scalar_select %p48, %s49, %s50
      %p54 = pneg %p48
      %p55 = scmp.eq.s32.totalorder %s27, 1
      %p56 = por %p54, %p55
      %p57 = scmp.ne.s32.totalorder %s49, %s52
      %p58 = scmp.eq.s32.totalorder %s27, 0
      %p59 = por %p57, %p58
      %p60 = scmp.ne.s32.totalorder %s49, %s52
      %p61 = scmp.eq.s32.totalorder %s32, 1
      %p62 = por %p60, %p61
      %p63 = scmp.ne.s32.totalorder %s52, %s53
      %p64 = scmp.eq.s32.totalorder %s32, 0
      %p65 = por %p63, %p64
      %p66 = scmp.ne.s32.totalorder %s52, %s53
      %p67 = scmp.eq.s32.totalorder %s33, 1
      %p68 = por %p66, %p67
      %p70 = scmp.ne.s32.totalorder %s53, %s69
      %p71 = scmp.eq.s32.totalorder %s33, 0
      %p72 = por %p70, %p71
      %s73 = ssub.s32 %s34, %s46
      %p74 = scmp.eq.s32.totalorder %s73, 0
      %s76 = sadd.s32 %s75, 1
      %s77 = scalar_select %p74, %s75, %s76
      %p80 = pneg %p74
      %p81 = scmp.eq.s32.totalorder %s27, 1
      %p82 = por %p80, %p81
      %p83 = scmp.ne.s32.totalorder %s75, %s78
      %p84 = scmp.eq.s32.totalorder %s27, 0
      %p85 = por %p83, %p84
      %p86 = scmp.ne.s32.totalorder %s75, %s78
      %p87 = scmp.eq.s32.totalorder %s32, 1
      %p88 = por %p86, %p87
      %p89 = scmp.ne.s32.totalorder %s78, %s79
      %p90 = scmp.eq.s32.totalorder %s32, 0
      %p91 = por %p89, %p90
      %p92 = scmp.ne.s32.totalorder %s78, %s79
      %p93 = scmp.eq.s32.totalorder %s33, 1
      %p94 = por %p92, %p93
      %p96 = scmp.ne.s32.totalorder %s79, %s95
      %p97 = scmp.eq.s32.totalorder %s33, 0
      %p98 = por %p96, %p97
      %s100 = sadd.s32 %s99, 1
      %p103 = scmp.eq.s32.totalorder %s27, 1
      %p104 = scmp.ne.s32.totalorder %s99, %s101
      %p105 = scmp.eq.s32.totalorder %s27, 0
      %p106 = por %p104, %p105
      %p107 = scmp.ne.s32.totalorder %s99, %s101
      %p108 = scmp.eq.s32.totalorder %s32, 1
      %p109 = por %p107, %p108
      %p110 = scmp.ne.s32.totalorder %s101, %s102
      %p111 = scmp.eq.s32.totalorder %s32, 0
      %p112 = por %p110, %p111
      %p113 = scmp.ne.s32.totalorder %s101, %s102
      %p114 = scmp.eq.s32.totalorder %s33, 1
      %p115 = por %p113, %p114
      %p117 = scmp.ne.s32.totalorder %s102, %s116
      %p118 = scmp.eq.s32.totalorder %s33, 0
      %p119 = por %p117, %p118
      %s121 = sadd.s32 %s120, 1
      %p124 = scmp.eq.s32.totalorder %s27, 1
      %p125 = scmp.ne.s32.totalorder %s120, %s122
      %p126 = scmp.eq.s32.totalorder %s27, 0
      %p127 = por %p125, %p126
      %p128 = scmp.ne.s32.totalorder %s120, %s122
      %p129 = scmp.eq.s32.totalorder %s32, 1
      %p130 = por %p128, %p129
      %p131 = scmp.ne.s32.totalorder %s122, %s123
      %p132 = scmp.eq.s32.totalorder %s32, 0
      %p133 = por %p131, %p132
      %p134 = scmp.ne.s32.totalorder %s122, %s123
      %p135 = scmp.eq.s32.totalorder %s33, 1
      %p136 = por %p134, %p135
      %p138 = scmp.ne.s32.totalorder %s123, %s137
      %p139 = scmp.eq.s32.totalorder %s33, 0
      %p140 = por %p138, %p139
      %s142 = sadd.s32 %s141, 1
      %p145 = scmp.eq.s32.totalorder %s27, 1
      %p146 = scmp.ne.s32.totalorder %s141, %s143
      %p147 = scmp.eq.s32.totalorder %s27, 0
      %p148 = por %p146, %p147
      %p149 = scmp.ne.s32.totalorder %s141, %s143
      %p150 = scmp.eq.s32.totalorder %s32, 1
      %p151 = por %p149, %p150
      %p152 = scmp.ne.s32.totalorder %s143, %s144
      %p153 = scmp.eq.s32.totalorder %s32, 0
      %p154 = por %p152, %p153
      %p155 = scmp.ne.s32.totalorder %s143, %s144
      %p156 = scmp.eq.s32.totalorder %s33, 1
      %p157 = por %p155, %p156
      %p159 = scmp.ne.s32.totalorder %s144, %s158
      %p160 = scmp.eq.s32.totalorder %s33, 0
      %p161 = por %p159, %p160
      %s163 = sadd.s32 %s162, 1
      %p166 = scmp.eq.s32.totalorder %s27, 1
      %p167 = scmp.ne.s32.totalorder %s162, %s164
      %p168 = scmp.eq.s32.totalorder %s27, 0
      %p169 = por %p167, %p168
      %p170 = scmp.ne.s32.totalorder %s162, %s164
      %p171 = scmp.eq.s32.totalorder %s32, 1
      %p172 = por %p170, %p171
      %p173 = scmp.ne.s32.totalorder %s164, %s165
      %p174 = scmp.eq.s32.totalorder %s32, 0
      %p175 = por %p173, %p174
      %p176 = scmp.ne.s32.totalorder %s164, %s165
      %p177 = scmp.eq.s32.totalorder %s33, 1
      %p178 = por %p176, %p177
      %p180 = scmp.ne.s32.totalorder %s165, %s179
      %p181 = scmp.eq.s32.totalorder %s33, 0
      %p182 = por %p180, %p181
      %s184 = sadd.s32 %s183, 1
      %p187 = scmp.eq.s32.totalorder %s27, 1
      %p188 = scmp.ne.s32.totalorder %s183, %s185
      %p189 = scmp.eq.s32.totalorder %s27, 0
      %p190 = por %p188, %p189
      %p191 = scmp.ne.s32.totalorder %s183, %s185
      %p192 = scmp.eq.s32.totalorder %s32, 1
      %p193 = por %p191, %p192
      %p194 = scmp.ne.s32.totalorder %s185, %s186
      %p195 = scmp.eq.s32.totalorder %s32, 0
      %p196 = por %p194, %p195
      %p197 = scmp.ne.s32.totalorder %s185, %s186
      %p198 = scmp.eq.s32.totalorder %s33, 1
      %p199 = por %p197, %p198
      %p201 = scmp.ne.s32.totalorder %s186, %s200
      %p202 = scmp.eq.s32.totalorder %s33, 0
      %p203 = por %p201, %p202
      %s205 = sadd.s32 %s204, 1
      %p208 = scmp.eq.s32.totalorder %s27, 1
      %p209 = scmp.ne.s32.totalorder %s204, %s206
      %p210 = scmp.eq.s32.totalorder %s27, 0
      %p211 = por %p209, %p210
      %p212 = scmp.ne.s32.totalorder %s204, %s206
      %p213 = scmp.eq.s32.totalorder %s32, 1
      %p214 = por %p212, %p213
      %p215 = scmp.ne.s32.totalorder %s206, %s207
      %p216 = scmp.eq.s32.totalorder %s32, 0
      %p217 = por %p215, %p216
      %p218 = scmp.ne.s32.totalorder %s206, %s207
      %p219 = scmp.eq.s32.totalorder %s33, 1
      %p220 = por %p218, %p219
      %p222 = scmp.ne.s32.totalorder %s207, %s221
      %p223 = scmp.eq.s32.totalorder %s33, 0
      %p224 = por %p222, %p223
      %s226 = sadd.s32 %s225, 1
      %p229 = scmp.eq.s32.totalorder %s27, 1
      %p230 = scmp.ne.s32.totalorder %s225, %s227
      %p231 = scmp.eq.s32.totalorder %s27, 0
      %p232 = por %p230, %p231
      %p233 = scmp.ne.s32.totalorder %s225, %s227
      %p234 = scmp.eq.s32.totalorder %s32, 1
      %p235 = por %p233, %p234
      %p236 = scmp.ne.s32.totalorder %s227, %s228
      %p237 = scmp.eq.s32.totalorder %s32, 0
      %p238 = por %p236, %p237
      %p239 = scmp.ne.s32.totalorder %s227, %s228
      %p240 = scmp.eq.s32.totalorder %s33, 1
      %p241 = por %p239, %p240
      %p243 = scmp.ne.s32.totalorder %s228, %s242
      %p244 = scmp.eq.s32.totalorder %s33, 0
      %p245 = por %p243, %p244
      %s247 = sadd.s32 %s246, 1
      %p250 = scmp.eq.s32.totalorder %s27, 1
      %p251 = scmp.ne.s32.totalorder %s246, %s248
      %p252 = scmp.eq.s32.totalorder %s27, 0
      %p253 = por %p251, %p252
      %p254 = scmp.ne.s32.totalorder %s246, %s248
      %p255 = scmp.eq.s32.totalorder %s32, 1
      %p256 = por %p254, %p255
      %p257 = scmp.ne.s32.totalorder %s248, %s249
      %p258 = scmp.eq.s32.totalorder %s32, 0
      %p259 = por %p257, %p258
      %p260 = scmp.ne.s32.totalorder %s248, %s249
      %p261 = scmp.eq.s32.totalorder %s33, 1
      %p262 = por %p260, %p261
      %p264 = scmp.ne.s32.totalorder %s249, %s263
      %p265 = scmp.eq.s32.totalorder %s33, 0
      %p266 = por %p264, %p265
      %s268 = sadd.s32 %s267, 1
      %p271 = scmp.eq.s32.totalorder %s27, 1
      %p272 = scmp.ne.s32.totalorder %s267, %s269
      %p273 = scmp.eq.s32.totalorder %s27, 0
      %p274 = por %p272, %p273
      %p275 = scmp.ne.s32.totalorder %s267, %s269
      %p276 = scmp.eq.s32.totalorder %s32, 1
      %p277 = por %p275, %p276
      %p278 = scmp.ne.s32.totalorder %s269, %s270
      %p279 = scmp.eq.s32.totalorder %s32, 0
      %p280 = por %p278, %p279
      %p281 = scmp.ne.s32.totalorder %s269, %s270
      %p282 = scmp.eq.s32.totalorder %s33, 1
      %p283 = por %p281, %p282
      %p285 = scmp.ne.s32.totalorder %s270, %s284
      %p286 = scmp.eq.s32.totalorder %s33, 0
      %p287 = por %p285, %p286
      %s289 = sadd.s32 %s288, 1
      %p292 = scmp.eq.s32.totalorder %s27, 1
      %p293 = scmp.ne.s32.totalorder %s288, %s290
      %p294 = scmp.eq.s32.totalorder %s27, 0
      %p295 = por %p293, %p294
      %p296 = scmp.ne.s32.totalorder %s288, %s290
      %p297 = scmp.eq.s32.totalorder %s32, 1
      %p298 = por %p296, %p297
      %p299 = scmp.ne.s32.totalorder %s290, %s291
      %p300 = scmp.eq.s32.totalorder %s32, 0
      %p301 = por %p299, %p300
      %p302 = scmp.ne.s32.totalorder %s290, %s291
      %p303 = scmp.eq.s32.totalorder %s33, 1
      %p304 = por %p302, %p303
      %p306 = scmp.ne.s32.totalorder %s291, %s305
      %p307 = scmp.eq.s32.totalorder %s33, 0
      %p308 = por %p306, %p307
      %s310 = sadd.s32 %s309, 1
      %p313 = scmp.eq.s32.totalorder %s27, 1
      %p314 = scmp.ne.s32.totalorder %s309, %s311
      %p315 = scmp.eq.s32.totalorder %s27, 0
      %p316 = por %p314, %p315
      %p317 = scmp.ne.s32.totalorder %s309, %s311
      %p318 = scmp.eq.s32.totalorder %s32, 1
      %p319 = por %p317, %p318
      %p320 = scmp.ne.s32.totalorder %s311, %s312
      %p321 = scmp.eq.s32.totalorder %s32, 0
      %p322 = por %p320, %p321
      %p323 = scmp.ne.s32.totalorder %s311, %s312
      %p324 = scmp.eq.s32.totalorder %s33, 1
      %p325 = por %p323, %p324
      %p327 = scmp.ne.s32.totalorder %s312, %s326
      %p328 = scmp.eq.s32.totalorder %s33, 0
      %p329 = por %p327, %p328
      %s331 = sadd.s32 %s330, 1
      %p334 = scmp.eq.s32.totalorder %s27, 1
      %p335 = scmp.ne.s32.totalorder %s330, %s332
      %p336 = scmp.eq.s32.totalorder %s27, 0
      %p337 = por %p335, %p336
      %p338 = scmp.ne.s32.totalorder %s330, %s332
      %p339 = scmp.eq.s32.totalorder %s32, 1
      %p340 = por %p338, %p339
      %p341 = scmp.ne.s32.totalorder %s332, %s333
      %p342 = scmp.eq.s32.totalorder %s32, 0
      %p343 = por %p341, %p342
      %p344 = scmp.ne.s32.totalorder %s332, %s333
      %p345 = scmp.eq.s32.totalorder %s33, 1
      %p346 = por %p344, %p345
      %p348 = scmp.ne.s32.totalorder %s333, %s347
      %p349 = scmp.eq.s32.totalorder %s33, 0
      %p350 = por %p348, %p349
      %s352 = sadd.s32 %s351, 1
      %p355 = scmp.eq.s32.totalorder %s27, 1
      %p356 = scmp.ne.s32.totalorder %s351, %s353
      %p357 = scmp.eq.s32.totalorder %s27, 0
      %p358 = por %p356, %p357
      %p359 = scmp.ne.s32.totalorder %s351, %s353
      %p360 = scmp.eq.s32.totalorder %s32, 1
      %p361 = por %p359, %p360
      %p362 = scmp.ne.s32.totalorder %s353, %s354
      %p363 = scmp.eq.s32.totalorder %s32, 0
      %p364 = por %p362, %p363
      %p365 = scmp.ne.s32.totalorder %s353, %s354
      %p366 = scmp.eq.s32.totalorder %s33, 1
      %p367 = por %p365, %p366
      %p369 = scmp.ne.s32.totalorder %s354, %s368
      %p370 = scmp.eq.s32.totalorder %s33, 0
      %p371 = por %p369, %p370
      %s372 = ssub.s32 %s34, %s46
      %p373 = scmp.eq.s32.totalorder %s372, 0
      %s375 = sadd.s32 %s374, 1
      %s376 = scalar_select %p373, %s374, %s375
      %p379 = pneg %p373
      %p380 = scmp.eq.s32.totalorder %s27, 1
      %p381 = por %p379, %p380
      %p382 = scmp.ne.s32.totalorder %s374, %s377
      %p383 = scmp.eq.s32.totalorder %s27, 0
      %p384 = por %p382, %p383
      %p385 = scmp.ne.s32.totalorder %s374, %s377
      %p386 = scmp.eq.s32.totalorder %s32, 1
      %p387 = por %p385, %p386
      %p388 = scmp.ne.s32.totalorder %s377, %s378
      %p389 = scmp.eq.s32.totalorder %s32, 0
      %p390 = por %p388, %p389
      %p391 = scmp.ne.s32.totalorder %s377, %s378
      %p392 = scmp.eq.s32.totalorder %s33, 1
      %p393 = por %p391, %p392
      %p395 = scmp.ne.s32.totalorder %s378, %s394
      %p396 = scmp.eq.s32.totalorder %s33, 0
      %p397 = por %p395, %p396
      %p398 = scmp.le.s32.totalorder 1, %s27
      %p399 = scmp.lt.s32.totalorder %s27, 3
      %p400 = pnand %p398, %p399
      %p401 = pneg %p400
      // Predicated region
      $region9: #{tpu_custom_call.1} parent=5 // pred_check
        _
      $region10: #{tpu_custom_call.1} parent=5 // pred_check_branch
        %403 = sbr.rel (%p400) target = $region12
      $region11: #{tpu_custom_call.1} parent=5 // pred_region
        %s404 = ssub.s32 %s27, 1
        // Predicated region
        $region13: #{tpu_custom_call.1} parent=11 // pred_check
          %p405 = pneg %p65
        $region14: #{tpu_custom_call.1} parent=11 // pred_check_branch
          %407 = sbr.rel (%p405) target = $region16
        $region15: #{tpu_custom_call.1} parent=11 // pred_region
          %s408 = smul.u32 2, %s36
          %410 = vsyncadd [#allocation3], 0
          %s411 = smul.addr %s408, 8
          %s412 = scalar_lea.hbm %s0, %s411
          %s413 = sshll.u32 %s412, 4
          %s414 = int_to_ptr.hbm [resolvable:$true] %s413
          %s415 = sshll.u32 [#allocation2], 4
          %s416 = int_to_ptr.vmem [resolvable:$true] %s415
          %421 = dma.hbm_to_vmem [thread:$0]  %s414, 256, %s416, [#allocation3], 128, 128, 8
        $region16: #{tpu_custom_call.1} parent=11 // pred_fallthru
          _
        // Predicated region
        $region17: #{tpu_custom_call.1} parent=11 // pred_check
          %p422 = pneg %p91
        $region18: #{tpu_custom_call.1} parent=11 // pred_check_branch
          %424 = sbr.rel (%p422) target = $region20
        $region19: #{tpu_custom_call.1} parent=11 // pred_region
          %s425 = smul.u32 2, %s36
          %427 = vsyncadd [#allocation6], 0
          %s428 = scalar_lea.hbm %s1, %s425
          %s429 = sshll.u32 %s428, 4
          %s430 = int_to_ptr.hbm [resolvable:$true] %s429
          %s431 = sshll.u32 [#allocation5], 4
          %s432 = int_to_ptr.vmem [resolvable:$true] %s431
          %437 = dma.hbm_to_vmem [thread:$0]  %s430, 32, %s432, [#allocation6], 16, 16, 1
        $region20: #{tpu_custom_call.1} parent=11 // pred_fallthru
          _
        // Predicated region
        $region21: #{tpu_custom_call.1} parent=11 // pred_check
          %p438 = pneg %p112
        $region22: #{tpu_custom_call.1} parent=11 // pred_check_branch
          %440 = sbr.rel (%p438) target = $region24
        $region23: #{tpu_custom_call.1} parent=11 // pred_region
          %442 = vsyncadd [#allocation6], 0
          %s444 = sshll.u32 %s2, 4
          %s445 = int_to_ptr.hbm [resolvable:$true] %s444
          %s446 = sshll.u32 [#allocation7], 4
          %s447 = int_to_ptr.vmem [resolvable:$true] %s446
          %449 = dma.hbm_to_vmem [thread:$0]  %s445, 16, %s447, [#allocation6]
        $region24: #{tpu_custom_call.1} parent=11 // pred_fallthru
          _
        // Predicated region
        $region25: #{tpu_custom_call.1} parent=11 // pred_check
          %p450 = pneg %p133
        $region26: #{tpu_custom_call.1} parent=11 // pred_check_branch
          %452 = sbr.rel (%p450) target = $region28
        $region27: #{tpu_custom_call.1} parent=11 // pred_region
          %454 = vsyncadd [#allocation9], 0
          %s455 = sshll.u32 %s3, 4
          %s456 = int_to_ptr.hbm [resolvable:$true] %s455
          %s457 = sshll.u32 [#allocation8], 4
          %s458 = int_to_ptr.vmem [resolvable:$true] %s457
          %463 = dma.hbm_to_vmem [thread:$0]  %s456, 2048, %s458, [#allocation9], 64, 64, 4
        $region28: #{tpu_custom_call.1} parent=11 // pred_fallthru
          _
        // Predicated region
        $region29: #{tpu_custom_call.1} parent=11 // pred_check
          %p464 = pneg %p154
        $region30: #{tpu_custom_call.1} parent=11 // pred_check_branch
          %466 = sbr.rel (%p464) target = $region32
        $region31: #{tpu_custom_call.1} parent=11 // pred_region
          _
        $region32: #{tpu_custom_call.1} parent=11 // pred_fallthru
          _
        // Predicated region
        $region33: #{tpu_custom_call.1} parent=11 // pred_check
          %p467 = pneg %p175
        $region34: #{tpu_custom_call.1} parent=11 // pred_check_branch
          %469 = sbr.rel (%p467) target = $region36
        $region35: #{tpu_custom_call.1} parent=11 // pred_region
          %471 = vsyncadd [#allocation9], 0
          %s472 = sshll.u32 %s5, 4
          %s473 = int_to_ptr.hbm [resolvable:$true] %s472
          %s474 = sshll.u32 [#allocation10], 4
          %s475 = int_to_ptr.vmem [resolvable:$true] %s474
          %480 = dma.hbm_to_vmem [thread:$0]  %s473, 512, %s475, [#allocation9], 64, 64, 4
        $region36: #{tpu_custom_call.1} parent=11 // pred_fallthru
          _
        // Predicated region
        $region37: #{tpu_custom_call.1} parent=11 // pred_check
          %p481 = pneg %p196
        $region38: #{tpu_custom_call.1} parent=11 // pred_check_branch
          %483 = sbr.rel (%p481) target = $region40
        $region39: #{tpu_custom_call.1} parent=11 // pred_region
          _
        $region40: #{tpu_custom_call.1} parent=11 // pred_fallthru
          _
        // Predicated region
        $region41: #{tpu_custom_call.1} parent=11 // pred_check
          %p484 = pneg %p217
        $region42: #{tpu_custom_call.1} parent=11 // pred_check_branch
          %486 = sbr.rel (%p484) target = $region44
        $region43: #{tpu_custom_call.1} parent=11 // pred_region
          _
        $region44: #{tpu_custom_call.1} parent=11 // pred_fallthru
          _
        // Predicated region
        $region45: #{tpu_custom_call.1} parent=11 // pred_check
          %p487 = pneg %p238
        $region46: #{tpu_custom_call.1} parent=11 // pred_check_branch
          %489 = sbr.rel (%p487) target = $region48
        $region47: #{tpu_custom_call.1} parent=11 // pred_region
          %491 = vsyncadd [#allocation12], 0
          %s492 = sshll.u32 %s8, 4
          %s493 = int_to_ptr.hbm [resolvable:$true] %s492
          %s494 = sshll.u32 [#allocation11], 4
          %s495 = int_to_ptr.vmem [resolvable:$true] %s494
          %500 = dma.hbm_to_vmem [thread:$0]  %s493, 32, %s495, [#allocation12], 16, 16, 1
        $region48: #{tpu_custom_call.1} parent=11 // pred_fallthru
          _
        // Predicated region
        $region49: #{tpu_custom_call.1} parent=11 // pred_check
          %p501 = pneg %p259
        $region50: #{tpu_custom_call.1} parent=11 // pred_check_branch
          %503 = sbr.rel (%p501) target = $region52
        $region51: #{tpu_custom_call.1} parent=11 // pred_region
          %505 = vsyncadd [#allocation12], 0
          %s506 = sshll.u32 %s9, 4
          %s507 = int_to_ptr.hbm [resolvable:$true] %s506
          %s508 = sshll.u32 [#allocation13], 4
          %s509 = int_to_ptr.vmem [resolvable:$true] %s508
          %514 = dma.hbm_to_vmem [thread:$0]  %s507, 2048, %s509, [#allocation12], 64, 64, 4
        $region52: #{tpu_custom_call.1} parent=11 // pred_fallthru
          _
        // Predicated region
        $region53: #{tpu_custom_call.1} parent=11 // pred_check
          %p515 = pneg %p280
        $region54: #{tpu_custom_call.1} parent=11 // pred_check_branch
          %517 = sbr.rel (%p515) target = $region56
        $region55: #{tpu_custom_call.1} parent=11 // pred_region
          _
        $region56: #{tpu_custom_call.1} parent=11 // pred_fallthru
          _
        // Predicated region
        $region57: #{tpu_custom_call.1} parent=11 // pred_check
          %p518 = pneg %p301
        $region58: #{tpu_custom_call.1} parent=11 // pred_check_branch
          %520 = sbr.rel (%p518) target = $region60
        $region59: #{tpu_custom_call.1} parent=11 // pred_region
          %522 = vsyncadd [#allocation15], 0
          %s523 = sshll.u32 %s11, 4
          %s524 = int_to_ptr.hbm [resolvable:$true] %s523
          %s525 = sshll.u32 [#allocation14], 4
          %s526 = int_to_ptr.vmem [resolvable:$true] %s525
          %531 = dma.hbm_to_vmem [thread:$0]  %s524, 2048, %s526, [#allocation15], 64, 64, 4
        $region60: #{tpu_custom_call.1} parent=11 // pred_fallthru
          _
        // Predicated region
        $region61: #{tpu_custom_call.1} parent=11 // pred_check
          %p532 = pneg %p322
        $region62: #{tpu_custom_call.1} parent=11 // pred_check_branch
          %534 = sbr.rel (%p532) target = $region64
        $region63: #{tpu_custom_call.1} parent=11 // pred_region
          _
        $region64: #{tpu_custom_call.1} parent=11 // pred_fallthru
          _
        // Predicated region
        $region65: #{tpu_custom_call.1} parent=11 // pred_check
          %p535 = pneg %p343
        $region66: #{tpu_custom_call.1} parent=11 // pred_check_branch
          %537 = sbr.rel (%p535) target = $region68
        $region67: #{tpu_custom_call.1} parent=11 // pred_region
          _
        $region68: #{tpu_custom_call.1} parent=11 // pred_fallthru
          _
        // Predicated region
        $region69: #{tpu_custom_call.1} parent=11 // pred_check
          %p538 = pneg %p364
        $region70: #{tpu_custom_call.1} parent=11 // pred_check_branch
          %540 = sbr.rel (%p538) target = $region72
        $region71: #{tpu_custom_call.1} parent=11 // pred_region
          %542 = vsyncadd [#allocation15], 0
          %s543 = sshll.u32 %s14, 4
          %s544 = int_to_ptr.hbm [resolvable:$true] %s543
          %s545 = sshll.u32 [#allocation16], 4
          %s546 = int_to_ptr.vmem [resolvable:$true] %s545
          %551 = dma.hbm_to_vmem [thread:$0]  %s544, 32, %s546, [#allocation15], 16, 16, 1
        $region72: #{tpu_custom_call.1} parent=11 // pred_fallthru
          _
      $region12: #{tpu_custom_call.1} parent=5 // pred_fallthru
        _
      %p552 = scmp.lt.s32.totalorder %s27, 2
      // Predicated region
      $region73: #{tpu_custom_call.1} parent=5 // pred_check
        %p553 = pneg %p552
      $region74: #{tpu_custom_call.1} parent=5 // pred_check_branch
        %555 = sbr.rel (%p553) target = $region76
      $region75: #{tpu_custom_call.1} parent=5 // pred_region
        _
      $region76: #{tpu_custom_call.1} parent=5 // pred_fallthru
        _
      %p556 = scmp.le.s32.totalorder 1, %s27
      %p557 = scmp.lt.s32.totalorder %s27, 3
      %p558 = pnand %p556, %p557
      %p559 = pneg %p558
      // Predicated region
      $region77: #{tpu_custom_call.1} parent=5 // pred_check
        _
      $region78: #{tpu_custom_call.1} parent=5 // pred_check_branch
        %561 = sbr.rel (%p558) target = $region80
      $region79: #{tpu_custom_call.1} parent=5 // pred_region
        %s562 = ssub.s32 %s27, 1
        // Predicated region
        $region81: #{tpu_custom_call.1} parent=79 // pred_check
          %p563 = pneg %p65
        $region82: #{tpu_custom_call.1} parent=79 // pred_check_branch
          %565 = sbr.rel (%p563) target = $region84
        $region83: #{tpu_custom_call.1} parent=79 // pred_region
          %567 = dma.done [#allocation3], 256
        $region84: #{tpu_custom_call.1} parent=79 // pred_fallthru
          _
        // Predicated region
        $region85: #{tpu_custom_call.1} parent=79 // pred_check
          %p568 = pneg %p91
        $region86: #{tpu_custom_call.1} parent=79 // pred_check_branch
          %570 = sbr.rel (%p568) target = $region88
        $region87: #{tpu_custom_call.1} parent=79 // pred_region
          %572 = dma.done [#allocation6], 32
        $region88: #{tpu_custom_call.1} parent=79 // pred_fallthru
          _
        // Predicated region
        $region89: #{tpu_custom_call.1} parent=79 // pred_check
          %p573 = pneg %p112
        $region90: #{tpu_custom_call.1} parent=79 // pred_check_branch
          %575 = sbr.rel (%p573) target = $region92
        $region91: #{tpu_custom_call.1} parent=79 // pred_region
          %577 = dma.done [#allocation6], 16
        $region92: #{tpu_custom_call.1} parent=79 // pred_fallthru
          _
        // Predicated region
        $region93: #{tpu_custom_call.1} parent=79 // pred_check
          %p578 = pneg %p133
        $region94: #{tpu_custom_call.1} parent=79 // pred_check_branch
          %580 = sbr.rel (%p578) target = $region96
        $region95: #{tpu_custom_call.1} parent=79 // pred_region
          %582 = dma.done [#allocation9], 2048
        $region96: #{tpu_custom_call.1} parent=79 // pred_fallthru
          _
        // Predicated region
        $region97: #{tpu_custom_call.1} parent=79 // pred_check
          %p583 = pneg %p175
        $region98: #{tpu_custom_call.1} parent=79 // pred_check_branch
          %585 = sbr.rel (%p583) target = $region100
        $region99: #{tpu_custom_call.1} parent=79 // pred_region
          %587 = dma.done [#allocation9], 512
        $region100: #{tpu_custom_call.1} parent=79 // pred_fallthru
          _
        // Predicated region
        $region101: #{tpu_custom_call.1} parent=79 // pred_check
          %p588 = pneg %p238
        $region102: #{tpu_custom_call.1} parent=79 // pred_check_branch
          %590 = sbr.rel (%p588) target = $region104
        $region103: #{tpu_custom_call.1} parent=79 // pred_region
          %592 = dma.done [#allocation12], 32
        $region104: #{tpu_custom_call.1} parent=79 // pred_fallthru
          _
        // Predicated region
        $region105: #{tpu_custom_call.1} parent=79 // pred_check
          %p593 = pneg %p259
        $region106: #{tpu_custom_call.1} parent=79 // pred_check_branch
          %595 = sbr.rel (%p593) target = $region108
        $region107: #{tpu_custom_call.1} parent=79 // pred_region
          %597 = dma.done [#allocation12], 2048
        $region108: #{tpu_custom_call.1} parent=79 // pred_fallthru
          _
        // Predicated region
        $region109: #{tpu_custom_call.1} parent=79 // pred_check
          %p598 = pneg %p301
        $region110: #{tpu_custom_call.1} parent=79 // pred_check_branch
          %600 = sbr.rel (%p598) target = $region112
        $region111: #{tpu_custom_call.1} parent=79 // pred_region
          %602 = dma.done [#allocation15], 2048
        $region112: #{tpu_custom_call.1} parent=79 // pred_fallthru
          _
        // Predicated region
        $region113: #{tpu_custom_call.1} parent=79 // pred_check
          %p603 = pneg %p364
        $region114: #{tpu_custom_call.1} parent=79 // pred_check_branch
          %605 = sbr.rel (%p603) target = $region116
        $region115: #{tpu_custom_call.1} parent=79 // pred_region
          %607 = dma.done [#allocation15], 32
        $region116: #{tpu_custom_call.1} parent=79 // pred_fallthru
          _
        %p608 = pneg %p65
        %p609 = pneg %p62
        %p610 = pneg %p91
        %p611 = pneg %p88
        %p612 = pneg %p112
        %p613 = pneg %p109
        %p614 = pneg %p133
        %p615 = pneg %p130
        %p616 = pneg %p154
        %p617 = pneg %p151
        %p618 = pneg %p175
        %p619 = pneg %p172
        %p620 = pneg %p196
        %p621 = pneg %p193
        %p622 = pneg %p217
        %p623 = pneg %p214
        %p624 = pneg %p238
        %p625 = pneg %p235
        %p626 = pneg %p259
        %p627 = pneg %p256
        %p628 = pneg %p280
        %p629 = pneg %p277
        %p630 = pneg %p301
        %p631 = pneg %p298
        %p632 = pneg %p322
        %p633 = pneg %p319
        %p634 = pneg %p343
        %p635 = pneg %p340
        %p636 = pneg %p364
        %p637 = pneg %p361
        %p638 = pneg %p390
        %p639 = pneg %p387
        %s640 = smul.u32 2, %s36
        %s641 = smul.u32 2, %s36
        %s642 = smul.u32 2, %s36
        %p644 = scmp.eq.s32.totalorder %s37, 0
        // Predicated region
        $region117: #{tpu_custom_call.1} parent=79 // pred_check
          %p645 = pneg %p644
        $region118: #{tpu_custom_call.1} parent=79 // pred_check_branch
          %647 = sbr.rel (%p645) target = $region120
        $region119: #{tpu_custom_call.1} parent=79 // pred_region
          %v648 = vld [vmem:[#allocation2] sm:$0xff]
          %v649 = vld [vmem:[#allocation2 + $0x8] sm:$0xff]
          %650 = vst [vmem:[#allocation17] sm:$0xff] %v648
          %651 = vst [vmem:[#allocation17 + $0x8] sm:$0xff] %v649
        $region120: #{tpu_custom_call.1} parent=79 // pred_fallthru
          _
        %v652 = vld [vmem:[#allocation17] sm:$0xff]
        %v653 = vld [vmem:[#allocation17 + $0x8] sm:$0xff]
        %v654 = vld [vmem:[#allocation7] sm:$0x1]
        %v655 = vpack.c.bf16 %v653, %v652
        %s656 = smul.u32 %s37, 16
        %s657 = smul.addr %s656, 4
        %s658 = scalar_lea.vmem [#allocation8], %s657
        %v659 = vld [vmem:[%s658] sm:$0xf]
        %v660 = vld [vmem:[%s658 + $0x4] sm:$0xf]
        %v661 = vld [vmem:[%s658 + $0x8] sm:$0xf]
        %v662 = vld [vmem:[%s658 + $0xc] sm:$0xf]
        %v663 = vld [vmem:[%s658 + $0x10] sm:$0xf]
        %v664 = vld [vmem:[%s658 + $0x14] sm:$0xf]
        %v665 = vld [vmem:[%s658 + $0x18] sm:$0xf]
        %v666 = vld [vmem:[%s658 + $0x1c] sm:$0xf]
        %v667 = vld [vmem:[%s658 + $0x20] sm:$0xf]
        %v668 = vld [vmem:[%s658 + $0x24] sm:$0xf]
        %v669 = vld [vmem:[%s658 + $0x28] sm:$0xf]
        %v670 = vld [vmem:[%s658 + $0x2c] sm:$0xf]
        %v671 = vld [vmem:[%s658 + $0x30] sm:$0xf]
        %v672 = vld [vmem:[%s658 + $0x34] sm:$0xf]
        %v673 = vld [vmem:[%s658 + $0x38] sm:$0xf]
        %v674 = vld [vmem:[%s658 + $0x3c] sm:$0xf]
        %s675 = scalar_lea.vmem %s4, %s37
        %v676 = vld [vmem:[%s675] sm:$0x1]
        %v678 = vperm.slane %v676, 0
        %v696 = vunpack.c.l.b16 %v659
        %v697 = vunpack.c.l.b16 %v660
        %v698 = vunpack.c.l.b16 %v661
        %v699 = vunpack.c.l.b16 %v662
        %v700 = vunpack.c.l.b16 %v663
        %v701 = vunpack.c.l.b16 %v664
        %v702 = vunpack.c.l.b16 %v665
        %v703 = vunpack.c.l.b16 %v666
        %v704 = vunpack.c.l.b16 %v667
        %v705 = vunpack.c.l.b16 %v668
        %v706 = vunpack.c.l.b16 %v669
        %v707 = vunpack.c.l.b16 %v670
        %v708 = vunpack.c.l.b16 %v671
        %v709 = vunpack.c.l.b16 %v672
        %v710 = vunpack.c.l.b16 %v673
        %v711 = vunpack.c.l.b16 %v674
        %v712 = vpack.c.b16 %v697, %v696
        %v713 = vpack.c.b16 %v699, %v698
        %v714 = vpack.c.b16 %v701, %v700
        %v715 = vpack.c.b16 %v703, %v702
        %v716 = vpack.c.b16 %v705, %v704
        %v717 = vpack.c.b16 %v707, %v706
        %v718 = vpack.c.b16 %v709, %v708
        %v719 = vpack.c.b16 %v711, %v710
        %728 = vmatpush.bf16.msra.mxu0 %v719
        %729 = vmatpush.bf16.msra.mxu0 %v718
        %730 = vmatpush.bf16.msra.mxu0 %v717
        %731 = vmatpush.bf16.msra.mxu0 %v716
        %732 = vmatpush.bf16.msra.mxu0 %v715
        %733 = vmatpush.bf16.msra.mxu0 %v714
        %734 = vmatpush.bf16.msra.mxu0 %v713
        %735 = vmatpush.bf16.msra.mxu0 %v712
        %736 = vmatmul.bf16.gmra.mxu0 %v655
        %v737 = vpop.f32.mrf.mxu0
        %v738 = vadd.f32 %v678, %v737
        %v739 = vpop.f32.mrf.mxu0
        %v740 = vadd.f32 %v678, %v739
        %741 = vdwg.mxu0
        %v742 = vpack.c.bf16 %v738, %v738
        %v743 = vpack.c.bf16 %v740, %v740
        %746 = vrot.lane.b32.xlu0 %v742, 120
        %v747 = vpop.permute.xlu0 %746
        %748 = vrot.lane.b32.xlu0 %v743, 120
        %v749 = vpop.permute.xlu0 %748
        %750 = vrot.lane.b32.xlu0 %v742, 112
        %v751 = vpop.permute.xlu0 %750
        %752 = vrot.lane.b32.xlu0 %v743, 112
        %v753 = vpop.permute.xlu0 %752
        %754 = vrot.lane.b32.xlu0 %v742, 104
        %v755 = vpop.permute.xlu0 %754
        %756 = vrot.lane.b32.xlu0 %v743, 104
        %v757 = vpop.permute.xlu0 %756
        %v758 = vunpack.c.l.b16 %v742
        %v759 = vpack.c.b16 %v758, %v758
        %760 = vrot.lane.b32.xlu0 %v759, 96
        %v761 = vpop.permute.xlu0 %760
        %vm762 = vcmask 64512
        %v764 = vsel %vm762, %v742, 0
        %v767 = vsel %vm762, %v761, 0
        %769 = vmatpush.bf16.xpose.msra.mxu0 0
        %770 = vmatpush.bf16.xpose.msra.mxu0 0
        %771 = vmatpush.bf16.xpose.msra.mxu0 0
        %772 = vmatpush.bf16.xpose.msra.mxu0 0
        %773 = vmatpush.bf16.xpose.msra.mxu0 0
        %774 = vmatpush.bf16.xpose.msra.mxu0 0
        %775 = vmatpush.bf16.xpose.msra.mxu0 0
        %776 = vmatpush.bf16.xpose.msra.mxu0 %v767
        %777 = vmatmul.bf16.gmra.mxu0 %v764
        %v778 = vpop.f32.mrf.mxu0
        %v779 = vadd.f32 0.0, %v778
        %v780 = vpop.f32.mrf.mxu0
        %781 = vdwg.mxu0
        %v782 = vunpack.c.l.b16 %v743
        %v783 = vpack.c.b16 %v782, %v782
        %784 = vrot.lane.b32.xlu0 %v783, 96
        %v785 = vpop.permute.xlu0 %784
        %v787 = vsel %vm762, %v743, 0
        %v790 = vsel %vm762, %v785, 0
        %792 = vmatpush.bf16.xpose.msra.mxu0 0
        %793 = vmatpush.bf16.xpose.msra.mxu0 0
        %794 = vmatpush.bf16.xpose.msra.mxu0 0
        %795 = vmatpush.bf16.xpose.msra.mxu0 0
        %796 = vmatpush.bf16.xpose.msra.mxu0 0
        %797 = vmatpush.bf16.xpose.msra.mxu0 0
        %798 = vmatpush.bf16.xpose.msra.mxu0 0
        %799 = vmatpush.bf16.xpose.msra.mxu0 %v790
        %800 = vmatmul.bf16.gmra.mxu0 %v787
        %v801 = vpop.f32.mrf.mxu0
        %v802 = vadd.f32 0.0, %v801
        %v803 = vpop.f32.mrf.mxu0
        %804 = vdwg.mxu0
        %v805 = vunpack.c.l.b16 %v747
        %v806 = vpack.c.b16 %v805, %v805
        %807 = vrot.lane.b32.xlu0 %v806, 96
        %v808 = vpop.permute.xlu0 %807
        %v810 = vsel %vm762, %v747, 0
        %v813 = vsel %vm762, %v808, 0
        %815 = vmatpush.bf16.xpose.msra.mxu0 0
        %816 = vmatpush.bf16.xpose.msra.mxu0 0
        %817 = vmatpush.bf16.xpose.msra.mxu0 0
        %818 = vmatpush.bf16.xpose.msra.mxu0 0
        %819 = vmatpush.bf16.xpose.msra.mxu0 0
        %820 = vmatpush.bf16.xpose.msra.mxu0 0
        %821 = vmatpush.bf16.xpose.msra.mxu0 0
        %822 = vmatpush.bf16.xpose.msra.mxu0 %v813
        %823 = vmatmul.bf16.gmra.mxu0 %v810
        %v824 = vpop.f32.mrf.mxu0
        %v825 = vadd.f32 0.0, %v824
        %v826 = vpop.f32.mrf.mxu0
        %827 = vdwg.mxu0
        %v828 = vunpack.c.l.b16 %v749
        %v829 = vpack.c.b16 %v828, %v828
        %830 = vrot.lane.b32.xlu0 %v829, 96
        %v831 = vpop.permute.xlu0 %830
        %v833 = vsel %vm762, %v749, 0
        %v836 = vsel %vm762, %v831, 0
        %838 = vmatpush.bf16.xpose.msra.mxu0 0
        %839 = vmatpush.bf16.xpose.msra.mxu0 0
        %840 = vmatpush.bf16.xpose.msra.mxu0 0
        %841 = vmatpush.bf16.xpose.msra.mxu0 0
        %842 = vmatpush.bf16.xpose.msra.mxu0 0
        %843 = vmatpush.bf16.xpose.msra.mxu0 0
        %844 = vmatpush.bf16.xpose.msra.mxu0 0
        %845 = vmatpush.bf16.xpose.msra.mxu0 %v836
        %846 = vmatmul.bf16.gmra.mxu0 %v833
        %v847 = vpop.f32.mrf.mxu0
        %v848 = vadd.f32 0.0, %v847
        %v849 = vpop.f32.mrf.mxu0
        %850 = vdwg.mxu0
        %v851 = vunpack.c.l.b16 %v751
        %v852 = vpack.c.b16 %v851, %v851
        %853 = vrot.lane.b32.xlu0 %v852, 96
        %v854 = vpop.permute.xlu0 %853
        %v856 = vsel %vm762, %v751, 0
        %v859 = vsel %vm762, %v854, 0
        %861 = vmatpush.bf16.xpose.msra.mxu0 0
        %862 = vmatpush.bf16.xpose.msra.mxu0 0
        %863 = vmatpush.bf16.xpose.msra.mxu0 0
        %864 = vmatpush.bf16.xpose.msra.mxu0 0
        %865 = vmatpush.bf16.xpose.msra.mxu0 0
        %866 = vmatpush.bf16.xpose.msra.mxu0 0
        %867 = vmatpush.bf16.xpose.msra.mxu0 0
        %868 = vmatpush.bf16.xpose.msra.mxu0 %v859
        %869 = vmatmul.bf16.gmra.mxu0 %v856
        %v870 = vpop.f32.mrf.mxu0
        %v871 = vadd.f32 0.0, %v870
        %v872 = vpop.f32.mrf.mxu0
        %873 = vdwg.mxu0
        %v874 = vunpack.c.l.b16 %v753
        %v875 = vpack.c.b16 %v874, %v874
        %876 = vrot.lane.b32.xlu0 %v875, 96
        %v877 = vpop.permute.xlu0 %876
        %v879 = vsel %vm762, %v753, 0
        %v882 = vsel %vm762, %v877, 0
        %884 = vmatpush.bf16.xpose.msra.mxu0 0
        %885 = vmatpush.bf16.xpose.msra.mxu0 0
        %886 = vmatpush.bf16.xpose.msra.mxu0 0
        %887 = vmatpush.bf16.xpose.msra.mxu0 0
        %888 = vmatpush.bf16.xpose.msra.mxu0 0
        %889 = vmatpush.bf16.xpose.msra.mxu0 0
        %890 = vmatpush.bf16.xpose.msra.mxu0 0
        %891 = vmatpush.bf16.xpose.msra.mxu0 %v882
        %892 = vmatmul.bf16.gmra.mxu0 %v879
        %v893 = vpop.f32.mrf.mxu0
        %v894 = vadd.f32 0.0, %v893
        %v895 = vpop.f32.mrf.mxu0
        %896 = vdwg.mxu0
        %v897 = vunpack.c.l.b16 %v755
        %v898 = vpack.c.b16 %v897, %v897
        %899 = vrot.lane.b32.xlu0 %v898, 96
        %v900 = vpop.permute.xlu0 %899
        %v902 = vsel %vm762, %v755, 0
        %v905 = vsel %vm762, %v900, 0
        %907 = vmatpush.bf16.xpose.msra.mxu0 0
        %908 = vmatpush.bf16.xpose.msra.mxu0 0
        %909 = vmatpush.bf16.xpose.msra.mxu0 0
        %910 = vmatpush.bf16.xpose.msra.mxu0 0
        %911 = vmatpush.bf16.xpose.msra.mxu0 0
        %912 = vmatpush.bf16.xpose.msra.mxu0 0
        %913 = vmatpush.bf16.xpose.msra.mxu0 0
        %914 = vmatpush.bf16.xpose.msra.mxu0 %v905
        %915 = vmatmul.bf16.gmra.mxu0 %v902
        %v916 = vpop.f32.mrf.mxu0
        %v917 = vadd.f32 0.0, %v916
        %v918 = vpop.f32.mrf.mxu0
        %919 = vdwg.mxu0
        %v920 = vunpack.c.l.b16 %v757
        %v921 = vpack.c.b16 %v920, %v920
        %922 = vrot.lane.b32.xlu0 %v921, 96
        %v923 = vpop.permute.xlu0 %922
        %v925 = vsel %vm762, %v757, 0
        %v928 = vsel %vm762, %v923, 0
        %930 = vmatpush.bf16.xpose.msra.mxu0 0
        %931 = vmatpush.bf16.xpose.msra.mxu0 0
        %932 = vmatpush.bf16.xpose.msra.mxu0 0
        %933 = vmatpush.bf16.xpose.msra.mxu0 0
        %934 = vmatpush.bf16.xpose.msra.mxu0 0
        %935 = vmatpush.bf16.xpose.msra.mxu0 0
        %936 = vmatpush.bf16.xpose.msra.mxu0 0
        %937 = vmatpush.bf16.xpose.msra.mxu0 %v928
        %938 = vmatmul.bf16.gmra.mxu0 %v925
        %v939 = vpop.f32.mrf.mxu0
        %v940 = vadd.f32 0.0, %v939
        %v941 = vpop.f32.mrf.mxu0
        %942 = vdwg.mxu0
        %v943 = vmul.f32 %v779, 0.35355338
        %v944 = vmul.f32 %v802, 0.35355338
        %v945 = vmul.f32 %v825, 0.35355338
        %v946 = vmul.f32 %v848, 0.35355338
        %v947 = vmul.f32 %v871, 0.35355338
        %v948 = vmul.f32 %v894, 0.35355338
        %v949 = vmul.f32 %v917, 0.35355338
        %v950 = vmul.f32 %v940, 0.35355338
        %v951 = vld [vmem:[#allocation5] sm:$0x1]
        %v952 = vld [vmem:[#allocation5 + $0x1] sm:$0x1]
        %v955 = vperm.slane %v951, 0
        %v956 = vperm.slane %v952, 0
        %v959 = vadd.f32 %v943, %v955
        %v960 = vadd.f32 %v944, %v956
        %v961 = vadd.f32 %v945, %v955
        %v962 = vadd.f32 %v946, %v956
        %v963 = vadd.f32 %v947, %v955
        %v964 = vadd.f32 %v948, %v956
        %v965 = vadd.f32 %v949, %v955
        %v966 = vadd.f32 %v950, %v956
        %v967 = vsel %vm762, %v959, -inf
        %968 = vmax.xlane.f32.xlu0 %v967
        %v969 = vpop.xlane.xlu0 %968
        %v970 = vsel %vm762, %v960, -inf
        %971 = vmax.xlane.f32.xlu0 %v970
        %v972 = vpop.xlane.xlu0 %971
        %v973 = vsel %vm762, %v961, -inf
        %974 = vmax.xlane.f32.xlu0 %v973
        %v975 = vpop.xlane.xlu0 %974
        %v976 = vsel %vm762, %v962, -inf
        %977 = vmax.xlane.f32.xlu0 %v976
        %v978 = vpop.xlane.xlu0 %977
        %v979 = vsel %vm762, %v963, -inf
        %980 = vmax.xlane.f32.xlu0 %v979
        %v981 = vpop.xlane.xlu0 %980
        %v982 = vsel %vm762, %v964, -inf
        %983 = vmax.xlane.f32.xlu0 %v982
        %v984 = vpop.xlane.xlu0 %983
        %v985 = vsel %vm762, %v965, -inf
        %986 = vmax.xlane.f32.xlu0 %v985
        %v987 = vpop.xlane.xlu0 %986
        %v988 = vsel %vm762, %v966, -inf
        %989 = vmax.xlane.f32.xlu0 %v988
        %v990 = vpop.xlane.xlu0 %989
        %v991 = vsub.f32 %v959, %v969
        %v992 = vsub.f32 %v960, %v972
        %v993 = vsub.f32 %v961, %v975
        %v994 = vsub.f32 %v962, %v978
        %v995 = vsub.f32 %v963, %v981
        %v996 = vsub.f32 %v964, %v984
        %v997 = vsub.f32 %v965, %v987
        %v998 = vsub.f32 %v966, %v990
        %v999 = vmul.f32 %v991, 1.442695
        %v1000 = vpow.pop %v999
        %v1001 = vmul.f32 %v992, 1.442695
        %v1002 = vpow.pop %v1001
        %v1003 = vmul.f32 %v993, 1.442695
        %v1004 = vpow.pop %v1003
        %v1005 = vmul.f32 %v994, 1.442695
        %v1006 = vpow.pop %v1005
        %v1007 = vmul.f32 %v995, 1.442695
        %v1008 = vpow.pop %v1007
        %v1009 = vmul.f32 %v996, 1.442695
        %v1010 = vpow.pop %v1009
        %v1011 = vmul.f32 %v997, 1.442695
        %v1012 = vpow.pop %v1011
        %v1013 = vmul.f32 %v998, 1.442695
        %v1014 = vpow.pop %v1013
        %v1015 = vsel %vm762, %v1000, 0.0
        %1016 = vadd.xlane.f32.xlu0 %v1015
        %v1017 = vpop.xlane.xlu0 %1016
        %v1018 = vsel %vm762, %v1002, 0.0
        %1019 = vadd.xlane.f32.xlu0 %v1018
        %v1020 = vpop.xlane.xlu0 %1019
        %v1021 = vsel %vm762, %v1004, 0.0
        %1022 = vadd.xlane.f32.xlu0 %v1021
        %v1023 = vpop.xlane.xlu0 %1022
        %v1024 = vsel %vm762, %v1006, 0.0
        %1025 = vadd.xlane.f32.xlu0 %v1024
        %v1026 = vpop.xlane.xlu0 %1025
        %v1027 = vsel %vm762, %v1008, 0.0
        %1028 = vadd.xlane.f32.xlu0 %v1027
        %v1029 = vpop.xlane.xlu0 %1028
        %v1030 = vsel %vm762, %v1010, 0.0
        %1031 = vadd.xlane.f32.xlu0 %v1030
        %v1032 = vpop.xlane.xlu0 %1031
        %v1033 = vsel %vm762, %v1012, 0.0
        %1034 = vadd.xlane.f32.xlu0 %v1033
        %v1035 = vpop.xlane.xlu0 %1034
        %v1036 = vsel %vm762, %v1014, 0.0
        %1037 = vadd.xlane.f32.xlu0 %v1036
        %v1038 = vpop.xlane.xlu0 %1037
        %v1039 = vrcp.pop %v1017
        %v1040 = vrcp.pop %v1020
        %v1041 = vrcp.pop %v1023
        %v1042 = vrcp.pop %v1026
        %v1043 = vrcp.pop %v1029
        %v1044 = vrcp.pop %v1032
        %v1045 = vrcp.pop %v1035
        %v1046 = vrcp.pop %v1038
        %v1047 = vmul.f32 %v1000, %v1039
        %v1048 = vmul.f32 %v1002, %v1040
        %v1049 = vmul.f32 %v1004, %v1041
        %v1050 = vmul.f32 %v1006, %v1042
        %v1051 = vmul.f32 %v1008, %v1043
        %v1052 = vmul.f32 %v1010, %v1044
        %v1053 = vmul.f32 %v1012, %v1045
        %v1054 = vmul.f32 %v1014, %v1046
        %v1055 = vpack.c.bf16 %v1047, %v1047
        %v1056 = vpack.c.bf16 %v1048, %v1048
        %v1057 = vpack.c.bf16 %v1049, %v1049
        %v1058 = vpack.c.bf16 %v1050, %v1050
        %v1059 = vpack.c.bf16 %v1051, %v1051
        %v1060 = vpack.c.bf16 %v1052, %v1052
        %v1061 = vpack.c.bf16 %v1053, %v1053
        %v1062 = vpack.c.bf16 %v1054, %v1054
        %1063 = vrot.lane.b32.xlu0 %v759, 64
        %v1064 = vpop.permute.xlu0 %1063
        %v1066 = vsel %vm762, %v1055, 0
        %vm1068 = vcmask 1043456
        %v1070 = vsel %vm1068, %v1064, 0
        %1072 = vmatpush.bf16.msra.mxu0 0
        %1073 = vmatpush.bf16.msra.mxu0 0
        %1074 = vmatpush.bf16.msra.mxu0 0
        %1075 = vmatpush.bf16.msra.mxu0 0
        %1076 = vmatpush.bf16.msra.mxu0 0
        %1077 = vmatpush.bf16.msra.mxu0 0
        %1078 = vmatpush.bf16.msra.mxu0 0
        %1079 = vmatpush.bf16.msra.mxu0 %v1070
        %1080 = vmatmul.bf16.gmra.mxu0 %v1066
        %v1081 = vpop.f32.mrf.mxu0
        %v1082 = vadd.f32 0.0, %v1081
        %v1083 = vpop.f32.mrf.mxu0
        %1084 = vdwg.mxu0
        %1085 = vrot.lane.b32.xlu0 %v783, 64
        %v1086 = vpop.permute.xlu0 %1085
        %v1088 = vsel %vm762, %v1056, 0
        %v1091 = vsel %vm1068, %v1086, 0
        %1093 = vmatpush.bf16.msra.mxu0 0
        %1094 = vmatpush.bf16.msra.mxu0 0
        %1095 = vmatpush.bf16.msra.mxu0 0
        %1096 = vmatpush.bf16.msra.mxu0 0
        %1097 = vmatpush.bf16.msra.mxu0 0
        %1098 = vmatpush.bf16.msra.mxu0 0
        %1099 = vmatpush.bf16.msra.mxu0 0
        %1100 = vmatpush.bf16.msra.mxu0 %v1091
        %1101 = vmatmul.bf16.gmra.mxu0 %v1088
        %v1102 = vpop.f32.mrf.mxu0
        %v1103 = vadd.f32 0.0, %v1102
        %v1104 = vpop.f32.mrf.mxu0
        %1105 = vdwg.mxu0
        %1106 = vrot.lane.b32.xlu0 %v806, 64
        %v1107 = vpop.permute.xlu0 %1106
        %v1109 = vsel %vm762, %v1057, 0
        %v1112 = vsel %vm1068, %v1107, 0
        %1114 = vmatpush.bf16.msra.mxu0 0
        %1115 = vmatpush.bf16.msra.mxu0 0
        %1116 = vmatpush.bf16.msra.mxu0 0
        %1117 = vmatpush.bf16.msra.mxu0 0
        %1118 = vmatpush.bf16.msra.mxu0 0
        %1119 = vmatpush.bf16.msra.mxu0 0
        %1120 = vmatpush.bf16.msra.mxu0 0
        %1121 = vmatpush.bf16.msra.mxu0 %v1112
        %1122 = vmatmul.bf16.gmra.mxu0 %v1109
        %v1123 = vpop.f32.mrf.mxu0
        %v1124 = vadd.f32 0.0, %v1123
        %v1125 = vpop.f32.mrf.mxu0
        %1126 = vdwg.mxu0
        %1127 = vrot.lane.b32.xlu0 %v829, 64
        %v1128 = vpop.permute.xlu0 %1127
        %v1130 = vsel %vm762, %v1058, 0
        %v1133 = vsel %vm1068, %v1128, 0
        %1135 = vmatpush.bf16.msra.mxu0 0
        %1136 = vmatpush.bf16.msra.mxu0 0
        %1137 = vmatpush.bf16.msra.mxu0 0
        %1138 = vmatpush.bf16.msra.mxu0 0
        %1139 = vmatpush.bf16.msra.mxu0 0
        %1140 = vmatpush.bf16.msra.mxu0 0
        %1141 = vmatpush.bf16.msra.mxu0 0
        %1142 = vmatpush.bf16.msra.mxu0 %v1133
        %1143 = vmatmul.bf16.gmra.mxu0 %v1130
        %v1144 = vpop.f32.mrf.mxu0
        %v1145 = vadd.f32 0.0, %v1144
        %v1146 = vpop.f32.mrf.mxu0
        %1147 = vdwg.mxu0
        %1148 = vrot.lane.b32.xlu0 %v852, 64
        %v1149 = vpop.permute.xlu0 %1148
        %v1151 = vsel %vm762, %v1059, 0
        %v1154 = vsel %vm1068, %v1149, 0
        %1156 = vmatpush.bf16.msra.mxu0 0
        %1157 = vmatpush.bf16.msra.mxu0 0
        %1158 = vmatpush.bf16.msra.mxu0 0
        %1159 = vmatpush.bf16.msra.mxu0 0
        %1160 = vmatpush.bf16.msra.mxu0 0
        %1161 = vmatpush.bf16.msra.mxu0 0
        %1162 = vmatpush.bf16.msra.mxu0 0
        %1163 = vmatpush.bf16.msra.mxu0 %v1154
        %1164 = vmatmul.bf16.gmra.mxu0 %v1151
        %v1165 = vpop.f32.mrf.mxu0
        %v1166 = vadd.f32 0.0, %v1165
        %v1167 = vpop.f32.mrf.mxu0
        %1168 = vdwg.mxu0
        %1169 = vrot.lane.b32.xlu0 %v875, 64
        %v1170 = vpop.permute.xlu0 %1169
        %v1172 = vsel %vm762, %v1060, 0
        %v1175 = vsel %vm1068, %v1170, 0
        %1177 = vmatpush.bf16.msra.mxu0 0
        %1178 = vmatpush.bf16.msra.mxu0 0
        %1179 = vmatpush.bf16.msra.mxu0 0
        %1180 = vmatpush.bf16.msra.mxu0 0
        %1181 = vmatpush.bf16.msra.mxu0 0
        %1182 = vmatpush.bf16.msra.mxu0 0
        %1183 = vmatpush.bf16.msra.mxu0 0
        %1184 = vmatpush.bf16.msra.mxu0 %v1175
        %1185 = vmatmul.bf16.gmra.mxu0 %v1172
        %v1186 = vpop.f32.mrf.mxu0
        %v1187 = vadd.f32 0.0, %v1186
        %v1188 = vpop.f32.mrf.mxu0
        %1189 = vdwg.mxu0
        %1190 = vrot.lane.b32.xlu0 %v898, 64
        %v1191 = vpop.permute.xlu0 %1190
        %v1193 = vsel %vm762, %v1061, 0
        %v1196 = vsel %vm1068, %v1191, 0
        %1198 = vmatpush.bf16.msra.mxu0 0
        %1199 = vmatpush.bf16.msra.mxu0 0
        %1200 = vmatpush.bf16.msra.mxu0 0
        %1201 = vmatpush.bf16.msra.mxu0 0
        %1202 = vmatpush.bf16.msra.mxu0 0
        %1203 = vmatpush.bf16.msra.mxu0 0
        %1204 = vmatpush.bf16.msra.mxu0 0
        %1205 = vmatpush.bf16.msra.mxu0 %v1196
        %1206 = vmatmul.bf16.gmra.mxu0 %v1193
        %v1207 = vpop.f32.mrf.mxu0
        %v1208 = vadd.f32 0.0, %v1207
        %v1209 = vpop.f32.mrf.mxu0
        %1210 = vdwg.mxu0
        %1211 = vrot.lane.b32.xlu0 %v921, 64
        %v1212 = vpop.permute.xlu0 %1211
        %v1214 = vsel %vm762, %v1062, 0
        %v1217 = vsel %vm1068, %v1212, 0
        %1219 = vmatpush.bf16.msra.mxu0 0
        %1220 = vmatpush.bf16.msra.mxu0 0
        %1221 = vmatpush.bf16.msra.mxu0 0
        %1222 = vmatpush.bf16.msra.mxu0 0
        %1223 = vmatpush.bf16.msra.mxu0 0
        %1224 = vmatpush.bf16.msra.mxu0 0
        %1225 = vmatpush.bf16.msra.mxu0 0
        %1226 = vmatpush.bf16.msra.mxu0 %v1217
        %1227 = vmatmul.bf16.gmra.mxu0 %v1214
        %v1228 = vpop.f32.mrf.mxu0
        %v1229 = vadd.f32 0.0, %v1228
        %v1230 = vpop.f32.mrf.mxu0
        %1231 = vdwg.mxu0
        %1234 = vrot.lane.b32.xlu0 %v1124, 8
        %v1235 = vpop.permute.xlu0 %1234
        %1236 = vrot.lane.b32.xlu0 %v1145, 8
        %v1237 = vpop.permute.xlu0 %1236
        %1242 = vrot.lane.b32.xlu0 %v1166, 16
        %v1243 = vpop.permute.xlu0 %1242
        %1244 = vrot.lane.b32.xlu0 %v1187, 16
        %v1245 = vpop.permute.xlu0 %1244
        %1250 = vrot.lane.b32.xlu0 %v1208, 24
        %v1251 = vpop.permute.xlu0 %1250
        %1252 = vrot.lane.b32.xlu0 %v1229, 24
        %v1253 = vpop.permute.xlu0 %1252
        %v1256 = vsel %vm762, %v1082, %v1235
        %v1257 = vsel %vm762, %v1103, %v1237
        %vm1258 = vcmask 130048
        %v1259 = vsel %vm1258, %v1256, %v1243
        %v1260 = vsel %vm1258, %v1257, %v1245
        %vm1261 = vcmask 195584
        %v1262 = vsel %vm1261, %v1259, %v1251
        %v1263 = vsel %vm1261, %v1260, %v1253
        %v1264 = vpack.c.bf16 %v1263, %v1262
        %s1265 = smul.u32 %s37, 4
        %s1266 = smul.addr %s1265, 4
        %s1267 = scalar_lea.vmem [#allocation10], %s1266
        %v1268 = vld [vmem:[%s1267] sm:$0xf]
        %v1269 = vld [vmem:[%s1267 + $0x4] sm:$0xf]
        %v1270 = vld [vmem:[%s1267 + $0x8] sm:$0xf]
        %v1271 = vld [vmem:[%s1267 + $0xc] sm:$0xf]
        %s1272 = scalar_lea.vmem %s6, %s37
        %v1273 = vld [vmem:[%s1272] sm:$0x1]
        %v1275 = vperm.slane %v1273, 0
        %v1281 = vunpack.c.l.b16 %v1268
        %v1282 = vunpack.c.l.b16 %v1269
        %v1283 = vunpack.c.l.b16 %v1270
        %v1284 = vunpack.c.l.b16 %v1271
        %v1285 = vpack.c.b16 %v1282, %v1281
        %v1286 = vpack.c.b16 %v1284, %v1283
        %vm1289 = vcmask 261120
        %v1291 = vsel %vm1289, %v1264, 0
        %1293 = vmatpush.bf16.msra.mxu0 0
        %1294 = vmatpush.bf16.msra.mxu0 0
        %1295 = vmatpush.bf16.msra.mxu0 0
        %1296 = vmatpush.bf16.msra.mxu0 0
        %1297 = vmatpush.bf16.msra.mxu0 0
        %1298 = vmatpush.bf16.msra.mxu0 0
        %1299 = vmatpush.bf16.msra.mxu0 %v1286
        %1300 = vmatpush.bf16.msra.mxu0 %v1285
        %1301 = vmatmul.bf16.gmra.mxu0 %v1291
        %v1302 = vpop.f32.mrf.mxu0
        %v1303 = vadd.f32 %v1275, %v1302
        %v1304 = vpop.f32.mrf.mxu0
        %v1305 = vadd.f32 %v1275, %v1304
        %1306 = vdwg.mxu0
        %v1307 = vadd.f32 %v652, %v1303
        %v1308 = vadd.f32 %v653, %v1305
        %s1309 = scalar_lea.vmem %s7, %s37
        %v1310 = vld [vmem:[%s1309] sm:$0x1]
        %s1311 = scalar_lea.vmem [#allocation11], %s37
        %v1312 = vld [vmem:[%s1311] sm:$0x1]
        %1313 = vadd.xlane.f32.xlu0 %v1307
        %v1314 = vpop.xlane.xlu0 %1313
        %1315 = vadd.xlane.f32.xlu0 %v1308
        %v1316 = vpop.xlane.xlu0 %1315
        %v1317 = vmul.f32 %v1314, 0.03125
        %v1318 = vmul.f32 %v1316, 0.03125
        %v1319 = vsub.f32 %v1307, %v1317
        %v1320 = vsub.f32 %v1308, %v1318
        %v1322 = vperm.slane %v654, 0
        %v1324 = vmul.f32 %v1319, %v1322
        %v1325 = vmul.f32 %v1320, %v1322
        %v1326 = vmul.f32 %v1324, %v1324
        %v1327 = vmul.f32 %v1325, %v1325
        %1328 = vadd.xlane.f32.xlu0 %v1326
        %v1329 = vpop.xlane.xlu0 %1328
        %1330 = vadd.xlane.f32.xlu0 %v1327
        %v1331 = vpop.xlane.xlu0 %1330
        %v1332 = vmul.f32 %v1329, 0.03125
        %v1333 = vmul.f32 %v1331, 0.03125
        %v1334 = vadd.f32 %v1332, 1e-05
        %v1335 = vadd.f32 %v1333, 1e-05
        %v1336 = vrsqrt.pop %v1334
        %v1337 = vmul.f32 %v1336, %v1334
        %v1338 = vmul.f32 %v1337, %v1336
        %v1339 = vmul.f32 0.5, %v1338
        %v1340 = vsub.f32 1.5, %v1339
        %v1341 = vmul.f32 %v1336, %v1340
        %vm1342 = vweird.f32 %v1334
        %vm1343 = vweird.f32 %v1336
        %vm1344 = vmor %vm1342, %vm1343
        %v1345 = vsel %vm1344, %v1336, %v1341
        %v1346 = vrsqrt.pop %v1335
        %v1347 = vmul.f32 %v1346, %v1335
        %v1348 = vmul.f32 %v1347, %v1346
        %v1349 = vmul.f32 0.5, %v1348
        %v1350 = vsub.f32 1.5, %v1349
        %v1351 = vmul.f32 %v1346, %v1350
        %vm1352 = vweird.f32 %v1335
        %vm1353 = vweird.f32 %v1346
        %vm1354 = vmor %vm1352, %vm1353
        %v1355 = vsel %vm1354, %v1346, %v1351
        %v1356 = vmul.f32 %v1324, %v1345
        %v1357 = vmul.f32 %v1325, %v1355
        %v1359 = vperm.slane %v1310, 0
        %v1361 = vmul.f32 %v1356, %v1359
        %v1362 = vmul.f32 %v1357, %v1359
        %v1364 = vperm.slane %v1312, 0
        %v1366 = vadd.f32 %v1361, %v1364
        %v1367 = vadd.f32 %v1362, %v1364
        %v1368 = vpack.c.bf16 %v1367, %v1366
        %s1369 = smul.addr %s656, 4
        %s1370 = scalar_lea.vmem [#allocation13], %s1369
        %v1371 = vld [vmem:[%s1370] sm:$0xf]
        %v1372 = vld [vmem:[%s1370 + $0x4] sm:$0xf]
        %v1373 = vld [vmem:[%s1370 + $0x8] sm:$0xf]
        %v1374 = vld [vmem:[%s1370 + $0xc] sm:$0xf]
        %v1375 = vld [vmem:[%s1370 + $0x10] sm:$0xf]
        %v1376 = vld [vmem:[%s1370 + $0x14] sm:$0xf]
        %v1377 = vld [vmem:[%s1370 + $0x18] sm:$0xf]
        %v1378 = vld [vmem:[%s1370 + $0x1c] sm:$0xf]
        %v1379 = vld [vmem:[%s1370 + $0x20] sm:$0xf]
        %v1380 = vld [vmem:[%s1370 + $0x24] sm:$0xf]
        %v1381 = vld [vmem:[%s1370 + $0x28] sm:$0xf]
        %v1382 = vld [vmem:[%s1370 + $0x2c] sm:$0xf]
        %v1383 = vld [vmem:[%s1370 + $0x30] sm:$0xf]
        %v1384 = vld [vmem:[%s1370 + $0x34] sm:$0xf]
        %v1385 = vld [vmem:[%s1370 + $0x38] sm:$0xf]
        %v1386 = vld [vmem:[%s1370 + $0x3c] sm:$0xf]
        %s1387 = scalar_lea.vmem %s10, %s37
        %v1388 = vld [vmem:[%s1387] sm:$0x1]
        %v1390 = vperm.slane %v1388, 0
        %v1408 = vunpack.c.l.b16 %v1371
        %v1409 = vunpack.c.l.b16 %v1372
        %v1410 = vunpack.c.l.b16 %v1373
        %v1411 = vunpack.c.l.b16 %v1374
        %v1412 = vunpack.c.l.b16 %v1375
        %v1413 = vunpack.c.l.b16 %v1376
        %v1414 = vunpack.c.l.b16 %v1377
        %v1415 = vunpack.c.l.b16 %v1378
        %v1416 = vunpack.c.l.b16 %v1379
        %v1417 = vunpack.c.l.b16 %v1380
        %v1418 = vunpack.c.l.b16 %v1381
        %v1419 = vunpack.c.l.b16 %v1382
        %v1420 = vunpack.c.l.b16 %v1383
        %v1421 = vunpack.c.l.b16 %v1384
        %v1422 = vunpack.c.l.b16 %v1385
        %v1423 = vunpack.c.l.b16 %v1386
        %v1424 = vpack.c.b16 %v1409, %v1408
        %v1425 = vpack.c.b16 %v1411, %v1410
        %v1426 = vpack.c.b16 %v1413, %v1412
        %v1427 = vpack.c.b16 %v1415, %v1414
        %v1428 = vpack.c.b16 %v1417, %v1416
        %v1429 = vpack.c.b16 %v1419, %v1418
        %v1430 = vpack.c.b16 %v1421, %v1420
        %v1431 = vpack.c.b16 %v1423, %v1422
        %1440 = vmatpush.bf16.msra.mxu0 %v1431
        %1441 = vmatpush.bf16.msra.mxu0 %v1430
        %1442 = vmatpush.bf16.msra.mxu0 %v1429
        %1443 = vmatpush.bf16.msra.mxu0 %v1428
        %1444 = vmatpush.bf16.msra.mxu0 %v1427
        %1445 = vmatpush.bf16.msra.mxu0 %v1426
        %1446 = vmatpush.bf16.msra.mxu0 %v1425
        %1447 = vmatpush.bf16.msra.mxu0 %v1424
        %1448 = vmatmul.bf16.gmra.mxu0 %v1368
        %v1449 = vpop.f32.mrf.mxu0
        %v1450 = vadd.f32 %v1390, %v1449
        %v1451 = vpop.f32.mrf.mxu0
        %v1452 = vadd.f32 %v1390, %v1451
        %1453 = vdwg.mxu0
        %v1454 = vmax.f32 %v1450, 0.0
        %v1455 = vmax.f32 %v1452, 0.0
        %v1456 = vpack.c.bf16 %v1455, %v1454
        %s1457 = smul.addr %s656, 4
        %s1458 = scalar_lea.vmem [#allocation14], %s1457
        %v1459 = vld [vmem:[%s1458] sm:$0xf]
        %v1460 = vld [vmem:[%s1458 + $0x4] sm:$0xf]
        %v1461 = vld [vmem:[%s1458 + $0x8] sm:$0xf]
        %v1462 = vld [vmem:[%s1458 + $0xc] sm:$0xf]
        %v1463 = vld [vmem:[%s1458 + $0x10] sm:$0xf]
        %v1464 = vld [vmem:[%s1458 + $0x14] sm:$0xf]
        %v1465 = vld [vmem:[%s1458 + $0x18] sm:$0xf]
        %v1466 = vld [vmem:[%s1458 + $0x1c] sm:$0xf]
        %v1467 = vld [vmem:[%s1458 + $0x20] sm:$0xf]
        %v1468 = vld [vmem:[%s1458 + $0x24] sm:$0xf]
        %v1469 = vld [vmem:[%s1458 + $0x28] sm:$0xf]
        %v1470 = vld [vmem:[%s1458 + $0x2c] sm:$0xf]
        %v1471 = vld [vmem:[%s1458 + $0x30] sm:$0xf]
        %v1472 = vld [vmem:[%s1458 + $0x34] sm:$0xf]
        %v1473 = vld [vmem:[%s1458 + $0x38] sm:$0xf]
        %v1474 = vld [vmem:[%s1458 + $0x3c] sm:$0xf]
        %s1475 = scalar_lea.vmem %s12, %s37
        %v1476 = vld [vmem:[%s1475] sm:$0x1]
        %v1478 = vperm.slane %v1476, 0
        %v1496 = vunpack.c.l.b16 %v1459
        %v1497 = vunpack.c.l.b16 %v1460
        %v1498 = vunpack.c.l.b16 %v1461
        %v1499 = vunpack.c.l.b16 %v1462
        %v1500 = vunpack.c.l.b16 %v1463
        %v1501 = vunpack.c.l.b16 %v1464
        %v1502 = vunpack.c.l.b16 %v1465
        %v1503 = vunpack.c.l.b16 %v1466
        %v1504 = vunpack.c.l.b16 %v1467
        %v1505 = vunpack.c.l.b16 %v1468
        %v1506 = vunpack.c.l.b16 %v1469
        %v1507 = vunpack.c.l.b16 %v1470
        %v1508 = vunpack.c.l.b16 %v1471
        %v1509 = vunpack.c.l.b16 %v1472
        %v1510 = vunpack.c.l.b16 %v1473
        %v1511 = vunpack.c.l.b16 %v1474
        %v1512 = vpack.c.b16 %v1497, %v1496
        %v1513 = vpack.c.b16 %v1499, %v1498
        %v1514 = vpack.c.b16 %v1501, %v1500
        %v1515 = vpack.c.b16 %v1503, %v1502
        %v1516 = vpack.c.b16 %v1505, %v1504
        %v1517 = vpack.c.b16 %v1507, %v1506
        %v1518 = vpack.c.b16 %v1509, %v1508
        %v1519 = vpack.c.b16 %v1511, %v1510
        %1528 = vmatpush.bf16.msra.mxu0 %v1519
        %1529 = vmatpush.bf16.msra.mxu0 %v1518
        %1530 = vmatpush.bf16.msra.mxu0 %v1517
        %1531 = vmatpush.bf16.msra.mxu0 %v1516
        %1532 = vmatpush.bf16.msra.mxu0 %v1515
        %1533 = vmatpush.bf16.msra.mxu0 %v1514
        %1534 = vmatpush.bf16.msra.mxu0 %v1513
        %1535 = vmatpush.bf16.msra.mxu0 %v1512
        %1536 = vmatmul.bf16.gmra.mxu0 %v1456
        %v1537 = vpop.f32.mrf.mxu0
        %v1538 = vadd.f32 %v1478, %v1537
        %v1539 = vpop.f32.mrf.mxu0
        %v1540 = vadd.f32 %v1478, %v1539
        %1541 = vdwg.mxu0
        %v1542 = vadd.f32 %v1366, %v1538
        %v1543 = vadd.f32 %v1367, %v1540
        %s1544 = scalar_lea.vmem %s13, %s37
        %v1545 = vld [vmem:[%s1544] sm:$0x1]
        %s1546 = scalar_lea.vmem [#allocation16], %s37
        %v1547 = vld [vmem:[%s1546] sm:$0x1]
        %1548 = vadd.xlane.f32.xlu0 %v1542
        %v1549 = vpop.xlane.xlu0 %1548
        %1550 = vadd.xlane.f32.xlu0 %v1543
        %v1551 = vpop.xlane.xlu0 %1550
        %v1552 = vmul.f32 %v1549, 0.03125
        %v1553 = vmul.f32 %v1551, 0.03125
        %v1554 = vsub.f32 %v1542, %v1552
        %v1555 = vsub.f32 %v1543, %v1553
        %v1556 = vmul.f32 %v1554, %v1322
        %v1557 = vmul.f32 %v1555, %v1322
        %v1558 = vmul.f32 %v1556, %v1556
        %v1559 = vmul.f32 %v1557, %v1557
        %1560 = vadd.xlane.f32.xlu0 %v1558
        %v1561 = vpop.xlane.xlu0 %1560
        %1562 = vadd.xlane.f32.xlu0 %v1559
        %v1563 = vpop.xlane.xlu0 %1562
        %v1564 = vmul.f32 %v1561, 0.03125
        %v1565 = vmul.f32 %v1563, 0.03125
        %v1566 = vadd.f32 %v1564, 1e-05
        %v1567 = vadd.f32 %v1565, 1e-05
        %v1568 = vrsqrt.pop %v1566
        %v1569 = vmul.f32 %v1568, %v1566
        %v1570 = vmul.f32 %v1569, %v1568
        %v1571 = vmul.f32 0.5, %v1570
        %v1572 = vsub.f32 1.5, %v1571
        %v1573 = vmul.f32 %v1568, %v1572
        %vm1574 = vweird.f32 %v1566
        %vm1575 = vweird.f32 %v1568
        %vm1576 = vmor %vm1574, %vm1575
        %v1577 = vsel %vm1576, %v1568, %v1573
        %v1578 = vrsqrt.pop %v1567
        %v1579 = vmul.f32 %v1578, %v1567
        %v1580 = vmul.f32 %v1579, %v1578
        %v1581 = vmul.f32 0.5, %v1580
        %v1582 = vsub.f32 1.5, %v1581
        %v1583 = vmul.f32 %v1578, %v1582
        %vm1584 = vweird.f32 %v1567
        %vm1585 = vweird.f32 %v1578
        %vm1586 = vmor %vm1584, %vm1585
        %v1587 = vsel %vm1586, %v1578, %v1583
        %v1588 = vmul.f32 %v1556, %v1577
        %v1589 = vmul.f32 %v1557, %v1587
        %v1591 = vperm.slane %v1545, 0
        %v1593 = vmul.f32 %v1588, %v1591
        %v1594 = vmul.f32 %v1589, %v1591
        %v1596 = vperm.slane %v1547, 0
        %v1598 = vadd.f32 %v1593, %v1596
        %v1599 = vadd.f32 %v1594, %v1596
        %1600 = vst [vmem:[#allocation17] sm:$0xff] %v1598
        %1601 = vst [vmem:[#allocation17 + $0x8] sm:$0xff] %v1599
        // Predicated region
        $region121: #{tpu_custom_call.1} parent=79 // pred_check
          %p1602 = pneg %p387
        $region122: #{tpu_custom_call.1} parent=79 // pred_check_branch
          %1604 = sbr.rel (%p1602) target = $region124
        $region123: #{tpu_custom_call.1} parent=79 // pred_region
          %s1605 = smul.u32 2, %s36
          %1607 = vsyncadd [#allocation4], 0
          %s1608 = smul.addr %s1605, 8
          %s1609 = scalar_lea.hbm %s15, %s1608
          %s1610 = sshll.u32 [#allocation17], 4
          %s1611 = int_to_ptr.vmem [resolvable:$true] %s1610
          %s1612 = sshll.u32 %s1609, 4
          %s1613 = int_to_ptr.hbm [resolvable:$true] %s1612
          %1618 = dma.vmem_to_hbm [thread:$0]  %s1611, 256, %s1613, [#allocation4], 128, 128, 8
        $region124: #{tpu_custom_call.1} parent=79 // pred_fallthru
          _
        // Predicated region
        $region125: #{tpu_custom_call.1} parent=79 // pred_check
          %p1619 = pneg %p387
        $region126: #{tpu_custom_call.1} parent=79 // pred_check_branch
          %1621 = sbr.rel (%p1619) target = $region128
        $region127: #{tpu_custom_call.1} parent=79 // pred_region
          %1623 = dma.done [#allocation4], 256
        $region128: #{tpu_custom_call.1} parent=79 // pred_fallthru
          _
      $region80: #{tpu_custom_call.1} parent=5 // pred_fallthru
        _
      %p1624 = scmp.le.s32.totalorder 2, %s27
      // Predicated region
      $region129: #{tpu_custom_call.1} parent=5 // pred_check
        %p1625 = pneg %p1624
      $region130: #{tpu_custom_call.1} parent=5 // pred_check_branch
        %1627 = sbr.rel (%p1625) target = $region132
      $region131: #{tpu_custom_call.1} parent=5 // pred_region
        %s1628 = ssub.s32 %s27, 2
      $region132: #{tpu_custom_call.1} parent=5 // pred_fallthru
        _
    $region6: #{tpu_custom_call.1} parent=1 // loop_footer
      %s31 = sadd.s32 1, %s27
    $region7: #{tpu_custom_call.1} parent=1 // loop_footer_branch
      %26 = sbr.rel target = $region3
    $region8: #{tpu_custom_call.1} parent=1 // loop_exit
      _
    %1629 = vsyncpa [#allocation3], 1
    %s1630 = scalar_lea.sflag [#allocation3], 1
    %1631 = vsyncpa %s1630, 1
    %1632 = vsyncpa [#allocation6], 1
    %1633 = vsyncpa [#allocation9], 1
    %1634 = vsyncpa [#allocation12], 1
    %1635 = vsyncpa [#allocation15], 1
    %1636 = vsyncpa [#allocation4], 1
    %s1637 = scalar_lea.sflag [#allocation4], 1
    %1638 = vsyncpa %s1637, 1

</llo_original>
